<compile_context>
chip_gen: v7x
topology: tpu7x:2x2x1
jax: 0.10.0
libtpu: 0.0.40
codegen_flags: <defaults>
</compile_context>

<pallas_src>
import math

import jax
import jax.numpy as jnp
from jax.experimental import pallas as pl
from jax.experimental.pallas import tpu as pltpu


MATMUL_DTYPE = jnp.bfloat16   # set to jnp.float32 for bit-closer numerics (slower)


# --------------------------------------------------------------------------------------
# math helpers (f32, 2-D elementwise + lane reductions -> lower cleanly in Mosaic)
# --------------------------------------------------------------------------------------
def _layernorm(x, gamma, beta, eps=1e-5):
    # PyTorch nn.LayerNorm: biased variance, eps inside sqrt.
    mean = jnp.mean(x, axis=-1, keepdims=True)
    xc = x - mean
    var = jnp.mean(xc * xc, axis=-1, keepdims=True)
    return xc * jax.lax.rsqrt(var + eps) * gamma + beta


def _mish(x):
    # x * tanh(softplus(x)) with tanh(softplus(x)) = n / (n + 2),  n = e^x * (e^x + 2).
    # ONE EUP transcendental per element (exp) + approx reciprocal, instead of
    # exp + log + tanh.  Keeps the PyTorch softplus threshold-20 behaviour
    # (tanh(x) == 1 in f32 for x > 20, so mish(x) == x there).
    w = jnp.exp(jnp.minimum(x, 20.0))
    n = w * (w + 2.0)
    t = n * pl.reciprocal(n + 2.0, approx=True)
    return jnp.where(x > 20.0, x, x * t)


def _entmax15(scores, n_bisect=6, n_newton=3):
    """Exact 1.5-entmax along the last axis (Peters & Martins 2019), sort-free.

    With z = (s - max(s)) / 2, tau* is the unique solution of
        f(tau) = sum_i max(z_i - tau, 0)^2 = 1,   tau* in [-1, -1/sqrt(n)].
    f is convex and decreasing, so:
      * a few bisection steps bracket tau* from below,
      * Newton steps (f'(tau) = -2 * sum max(z - tau, 0)) converge quadratically and,
        started from below, never overshoot tau*,
      * the exact threshold is then recovered in closed form from the identified
        support, so the result matches the sort-based reference to float precision.
    ~3x fewer VPU ops per score element than the previous 30-step pure bisection.
    """
    z = (scores - jnp.max(scores, axis=-1, keepdims=True)) * 0.5
    lo = jnp.full(z.shape[:-1] + (1,), -1.0, dtype=jnp.float32)   # f(lo) >= 1
    hi = jnp.zeros_like(lo)                                       # f(hi) == 0 < 1

    def bisect(_, carry):
        lo, hi = carry
        mid = (lo + hi) * 0.5
        p = jnp.maximum(z - mid, 0.0)
        ge = jnp.sum(p * p, axis=-1, keepdims=True) >= 1.0
        return jnp.where(ge, mid, lo), jnp.where(ge, hi, mid)

    lo, _ = jax.lax.fori_loop(0, n_bisect, bisect, (lo, hi))

    def newton(_, tau):
        p = jnp.maximum(z - tau, 0.0)
        f = jnp.sum(p * p, axis=-1, keepdims=True) - 1.0          # >= 0 from below
        g = jnp.sum(p, axis=-1, keepdims=True)                    # = -f'(tau)/2 > 0
        return tau + 0.5 * f / g                                  # per-row scalar divide

    tau0 = jax.lax.fori_loop(0, n_newton, newton, lo)

    # Exact tau for the support {z > tau0}  (tau0 <= tau* < 0, max element always in).
    # NOTE: body deliberately stays f32 (tau is precision sensitive); bf16 VPU lanes on
    # v6e/v7x could roughly halve its cost if validated against the sorted reference.
    mask = (z > tau0).astype(jnp.float32)
    cnt = jnp.sum(mask, axis=-1, keepdims=True)
    s1 = jnp.sum(z * mask, axis=-1, keepdims=True)
    s2 = jnp.sum(z * z * mask, axis=-1, keepdims=True)
    tau = (s1 - jnp.sqrt(jnp.maximum(s1 * s1 - cnt * (s2 - 1.0), 0.0))) / cnt
    p = jnp.maximum(z - tau, 0.0)
    return p * p


# --------------------------------------------------------------------------------------
# kernel 1: LayerNorm1 + fused KV projection, emitted head-major (B, H, S, dh)
# --------------------------------------------------------------------------------------
def _make_kv_kernel(heads, d_model, compute_dtype):
    dh = d_model // heads

    def kernel(x_ref, g1_ref, be1_ref, wkv_ref, bkv_ref, k_ref, v_ref):
        x = x_ref[0].astype(jnp.float32)                                   # (TS, D)
        y = _layernorm(x, g1_ref[...], be1_ref[...])
        kv = jnp.dot(y.astype(compute_dtype), wkv_ref[...],               # one (D, 2D) matmul
                     preferred_element_type=jnp.float32) + bkv_ref[...]
        # Head-major writeback: the per-head lane slices happen exactly once here,
        # so kernel 2 never re-slices K/V for every head on every query tile.
        for hh in range(heads):
            k_ref[0, hh] = kv[:, hh * dh:(hh + 1) * dh].astype(k_ref.dtype)
            v_ref[0, hh] = kv[:, d_model + hh * dh:
                              d_model + (hh + 1) * dh].astype(v_ref.dtype)

    return kernel


# --------------------------------------------------------------------------------------
# kernel 2: per-head streamed entmax attention + Wo + residuals + LN2 + FFN (Mish)
# grid = (B, S//TQ, heads); only one head's K/V block is resident at a time.
# --------------------------------------------------------------------------------------
def _make_attn_ffn_kernel(heads, d_model, hidden, h_tile, n_chunks, compute_dtype):
    dh = d_model // heads
    scale = 1.0 / math.sqrt(dh)
    cd = compute_dtype

    def kernel(x_ref, k_ref, v_ref,
               wq_ref, bq_ref, wo_ref, bo_ref,
               g1_ref, be1_ref, g2_ref, be2_ref,
               w1_ref, b1_ref, w2_ref, b2_ref,
               o_ref, q_hm, ctx_acc):
        h = pl.program_id(2)
        tq = x_ref.shape[1]

        # ---- once per query tile (head 0): LayerNorm1 + ONE K=D Q projection ----
        @pl.when(h == 0)
        def _():
            x = x_ref[0].astype(jnp.float32)
            y1 = _layernorm(x, g1_ref[...], be1_ref[...])
            qf = jnp.dot(y1.astype(cd), wq_ref[...],
                         preferred_element_type=jnp.float32) + bq_ref[...]
            for hh in range(heads):                       # static slices, head-major scratch
                q_hm[hh] = qf[:, hh * dh:(hh + 1) * dh].astype(q_hm.dtype)

        # ---- this head's entmax-1.5 attention over the full key axis ----
        q_h = q_hm[h]                                     # (TQ, dh) leading-index read
        k_h = k_ref[0, 0]                                 # (S,  dh) streamed per head
        v_h = v_ref[0, 0]                                 # (S,  dh) streamed per head
        scores = jax.lax.dot_general(
            q_h, k_h, (((1,), (1,)), ((), ())),
            preferred_element_type=jnp.float32) * scale   # (TQ, S) f32
        attn = _entmax15(scores)                          # f32 (exact zeros preserved)
        ctx_h = jnp.dot(attn.astype(cd), v_h,             # bf16 PV matmul, f32 acc
                        preferred_element_type=jnp.float32)
        # Static lane-offset store of this head's context (no lane-axis concatenate).
        for hh in range(heads):
            @pl.when(h == hh)
            def _(hh=hh):
                ctx_acc[:, hh * dh:(hh + 1) * dh] = ctx_h.astype(ctx_acc.dtype)

        # ---- once per query tile (last head): Wo, residual, LN2, chunked FFN ----
        @pl.when(h == heads - 1)
        def _():
            x = x_ref[0].astype(jnp.float32)
            attn_out = jnp.dot(ctx_acc[...], wo_ref[...],            # ONE K=D matmul
                               preferred_element_type=jnp.float32) + bo_ref[...]
            x = x + attn_out                                         # residual 1
            y2 = _layernorm(x, g2_ref[...], be2_ref[...]).astype(cd)

            if n_chunks == 1:
                h1 = jnp.dot(y2, w1_ref[...],
                             preferred_element_type=jnp.float32) + b1_ref[...]
                ff = jnp.dot(_mish(h1).astype(cd), w2_ref[...],
                             preferred_element_type=jnp.float32)
            else:
                # fori_loop keeps exactly one (TQ, TH) h1 slab live (a static Python
                # for would not bound live ranges).
                def body(c, ff):
                    col = pl.multiple_of(c * h_tile, h_tile)
                    h1 = jnp.dot(y2, w1_ref[:, pl.ds(col, h_tile)],
                                 preferred_element_type=jnp.float32) \
                         + b1_ref[:, pl.ds(col, h_tile)]
                    return ff + jnp.dot(_mish(h1).astype(cd),
                                        w2_ref[pl.ds(col, h_tile), :],
                                        preferred_element_type=jnp.float32)
                ff = jax.lax.fori_loop(0, n_chunks, body,
                                       jnp.zeros((tq, d_model), jnp.float32))

            o_ref[0] = (x + ff + b2_ref[...]).astype(o_ref.dtype)    # residual 2

    return kernel


# --------------------------------------------------------------------------------------
# wrapper
# --------------------------------------------------------------------------------------
def _pick_tile(n, pref):
    """Largest tile <= pref that divides n and is a multiple of 8 (else the full dim)."""
    if n <= pref:
        return n
    t = pref - pref % 8
    while t >= 8:
        if n % t == 0:
            return t
        t -= 8
    return n


def _inv_spec(shape, ngrid, single_buffer):
    """Grid-invariant operand: whole array resident; single-buffered when supported."""
    if ngrid == 2:
        idx = lambda b, s: (0,) * len(shape)
    else:
        idx = lambda b, t, h: (0,) * len(shape)
    if single_buffer:
        return pl.BlockSpec(shape, idx, pipeline_mode=pl.Buffered(1))
    return pl.BlockSpec(shape, idx)


def _vmem_cap_bytes():
    try:
        cap = getattr(pltpu.get_tpu_info(), "vmem_capacity_bytes", None)
        if cap:
            return int(cap)
    except Exception:
        pass
    return 64 * 2**20   # conservative fallback (v7x-sized)


def _encoder_layer_impl(x, params, heads, *, q_tile, s_tile, h_tile,
                        compute_dtype, single_buffer_weights):
    B, S, D = x.shape
    hidden = params["w1"].shape[1]
    assert D % heads == 0
    dh = D // heads

    TS = _pick_tile(S, s_tile)     # sequence tile for the KV projection kernel
    TQ = _pick_tile(S, q_tile)     # query tile for the attention + FFN kernel
    # hidden chunk: multiple of 128 when chunking (lane-aligned dynamic slices),
    # otherwise fall back to the whole hidden dimension.
    if hidden > h_tile:
        TH = (h_tile // 128) * 128
        if TH == 0 or hidden % TH:
            TH = hidden
    else:
        TH = hidden
    n_chunks = hidden // TH

    cd = compute_dtype
    cb = jnp.dtype(cd).itemsize
    xb = jnp.dtype(x.dtype).itemsize
    sb = single_buffer_weights

    # Host-side fusion of the K/V projection into one (D, 2D) weight / (1, 2D) bias.
    wq = params["wq"].astype(cd)
    wkv = jnp.concatenate([params["wk"], params["wv"]], axis=1).astype(cd)
    bkv = jnp.concatenate([params["bk"], params["bv"]], axis=1)
    wo = params["wo"].astype(cd)
    w1 = params["w1"].astype(cd)
    w2 = params["w2"].astype(cd)

    # ---- VMEM budget: ~85% of this chip's capacity (128 MiB v5e/v6e, 64 MiB v7x) ----
    cap = _vmem_cap_bytes()
    dh_pad = -(-dh // 128) * 128
    wbuf = 1 if sb else 2
    est = 2 * TQ * D * (2 * xb)                               # x + out tiles (double buffered)
    est += 2 * 2 * S * dh_pad * cb                            # one head's K and V (double buffered)
    est += wbuf * ((2 * D * D + 2 * D * hidden) * cb + (8 * D + 2 * hidden) * 4)
    est += heads * TQ * dh_pad * cb + TQ * D * cb             # q / ctx scratch
    est += 4 * TQ * S * 4 + 2 * TQ * TH * 4                   # entmax temporaries + FFN slab
    vmem_limit = int(min(max(2 * est, 32 * 2**20), int(cap * 0.85)))

    # ---------- kernel 1: LayerNorm1 + fused KV projection (head-major K/V) ----------
    kv_struct = jax.ShapeDtypeStruct((B, heads, S, dh), cd)
    k, v = pl.pallas_call(
        _make_kv_kernel(heads, D, cd),
        grid=(B, S // TS),
        in_specs=[
            pl.BlockSpec((1, TS, D), lambda b, s: (b, s, 0)),   # x tile
            _inv_spec((1, D), 2, sb), _inv_spec((1, D), 2, sb),         # ln1 gamma, beta
            _inv_spec((D, 2 * D), 2, sb), _inv_spec((1, 2 * D), 2, sb),  # fused Wkv, bkv
        ],
        out_specs=[pl.BlockSpec((1, heads, TS, dh), lambda b, s: (b, 0, s, 0))] * 2,
        out_shape=[kv_struct, kv_struct],
        compiler_params=pltpu.CompilerParams(
            dimension_semantics=("parallel", "parallel"),
            vmem_limit_bytes=vmem_limit),
        cost_estimate=pl.CostEstimate(
            flops=2 * B * S * D * 2 * D,
            transcendentals=B * S,
            bytes_accessed=B * S * D * xb + 2 * D * D * cb + 2 * B * S * D * cb),
    )(x, params["ln1_g"], params["ln1_b"], wkv, bkv)

    # ---------- kernel 2: per-head streamed entmax attention + Wo + FFN ----------
    out = pl.pallas_call(
        _make_attn_ffn_kernel(heads, D, hidden, TH, n_chunks, cd),
        grid=(B, S // TQ, heads),
        in_specs=[
            pl.BlockSpec((1, TQ, D), lambda b, t, h: (b, t, 0)),        # x (residual / Q source)
            pl.BlockSpec((1, 1, S, dh), lambda b, t, h: (b, h, 0, 0)),  # this head's K
            pl.BlockSpec((1, 1, S, dh), lambda b, t, h: (b, h, 0, 0)),  # this head's V
            _inv_spec((D, D), 3, sb), _inv_spec((1, D), 3, sb),         # wq, bq
            _inv_spec((D, D), 3, sb), _inv_spec((1, D), 3, sb),         # wo, bo
            _inv_spec((1, D), 3, sb), _inv_spec((1, D), 3, sb),         # ln1 gamma, beta
            _inv_spec((1, D), 3, sb), _inv_spec((1, D), 3, sb),         # ln2 gamma, beta
            _inv_spec((D, hidden), 3, sb), _inv_spec((1, hidden), 3, sb),  # w1, b1
            _inv_spec((hidden, D), 3, sb), _inv_spec((1, D), 3, sb),       # w2, b2
        ],
        out_specs=pl.BlockSpec((1, TQ, D), lambda b, t, h: (b, t, 0)),
        out_shape=jax.ShapeDtypeStruct((B, S, D), x.dtype),
        scratch_shapes=[
            pltpu.VMEM((heads, TQ, dh), cd),   # per-head Q, filled once per query tile
            pltpu.VMEM((TQ, D), cd),           # assembled per-head contexts
        ],
        compiler_params=pltpu.CompilerParams(
            # Only b is "parallel": a v7x megacore splits batches (disjoint K/V per
            # core) instead of query tiles; h carries scratch state -> "arbitrary".
            dimension_semantics=("parallel", "arbitrary", "arbitrary"),
            vmem_limit_bytes=vmem_limit),
        cost_estimate=pl.CostEstimate(
            flops=B * (4 * S * D * D + 4 * S * S * D + 4 * S * D * hidden),
            transcendentals=B * S * (hidden + 2),
            bytes_accessed=2 * B * S * D * xb
                           + 2 * B * (S // TQ) * S * D * cb
                           + (2 * D * D + 2 * D * hidden) * cb),
    )(x, k, v,
      wq, params["bq"], wo, params["bo"],
      params["ln1_g"], params["ln1_b"], params["ln2_g"], params["ln2_b"],
      w1, params["b1"], w2, params["b2"])
    return out


def encoder_layer(x, params, heads, *, q_tile=256, s_tile=256, h_tile=512,
                  compute_dtype=MATMUL_DTYPE):
    try:
        out = _encoder_layer_impl(x, params, heads, q_tile=q_tile, s_tile=s_tile,
                                  h_tile=h_tile, compute_dtype=compute_dtype,
                                  single_buffer_weights=True)
        jax.block_until_ready(out)
        return out
    except Exception:
        # pipeline_mode=pl.Buffered(1) (single-buffered invariant weights) not
        # supported in this JAX build -> fall back to default double buffering.
        return _encoder_layer_impl(x, params, heads, q_tile=q_tile, s_tile=s_tile,
                                   h_tile=h_tile, compute_dtype=compute_dtype,
                                   single_buffer_weights=False)


# --------------------------------------------------------------------------------------
# parameter init mirroring PyTorch nn.Linear / nn.LayerNorm defaults
# --------------------------------------------------------------------------------------
def _init_params(key, d_model, heads, hidden):
    ks = jax.random.split(key, 12)

    def lin(kw, kb, fan_in, fan_out):
        bound = 1.0 / math.sqrt(fan_in)
        w = jax.random.uniform(kw, (fan_in, fan_out), jnp.float32, -bound, bound)
        b = jax.random.uniform(kb, (1, fan_out), jnp.float32, -bound, bound)
        return w, b

    wq, bq = lin(ks[0], ks[1], d_model, d_model)
    wk, bk = lin(ks[2], ks[3], d_model, d_model)
    wv, bv = lin(ks[4], ks[5], d_model, d_model)
    wo, bo = lin(ks[6], ks[7], d_model, d_model)
    w1, b1 = lin(ks[8], ks[9], d_model, hidden)
    w2, b2 = lin(ks[10], ks[11], hidden, d_model)
    return {
        "ln1_g": jnp.ones((1, d_model), jnp.float32),
        "ln1_b": jnp.zeros((1, d_model), jnp.float32),
        "wq": wq, "bq": bq, "wk": wk, "bk": bk, "wv": wv, "bv": bv,
        "wo": wo, "bo": bo,
        "ln2_g": jnp.ones((1, d_model), jnp.float32),
        "ln2_b": jnp.zeros((1, d_model), jnp.float32),
        "w1": w1, "b1": b1, "w2": w2, "b2": b2,
    }


if __name__ == "__main__":
    B, S, D, HEADS, HIDDEN = 2, 8, 32, 4, 64
    key = jax.random.PRNGKey(0)
    kx, kp = jax.random.split(key)
    x = jax.random.normal(kx, (B, S, D), jnp.float32)
    params = _init_params(kp, D, HEADS, HIDDEN)

    out = encoder_layer(x, params, HEADS)
    jax.block_until_ready(out)
    assert out.shape == (B, S, D)
    assert bool(jnp.all(jnp.isfinite(out)))
    print("KERNEL_OK")
</pallas_src>

<mosaic_0001>
module attributes {stable_mosaic.version = 11 : i64} {
  func.func @kernel(%arg0: i32, %arg1: i32, %arg2: memref<1x8x32xf32, #tpu.memory_space<vmem>>, %arg3: memref<1x32xf32, #tpu.memory_space<vmem>>, %arg4: memref<1x32xf32, #tpu.memory_space<vmem>>, %arg5: memref<32x64xbf16, #tpu.memory_space<vmem>>, %arg6: memref<1x64xf32, #tpu.memory_space<vmem>>, %arg7: memref<1x4x8x8xbf16, #tpu.memory_space<vmem>>, %arg8: memref<1x4x8x8xbf16, #tpu.memory_space<vmem>>) attributes {dimension_semantics = [#tpu.dimension_semantics<parallel>, #tpu.dimension_semantics<parallel>], iteration_bounds = array<i64: 2, 1>, scalar_prefetch = 0 : i64, scratch_operands = 0 : i64, tpu.core_type = #tpu.core_type<tc>, window_params = [{transform_indices = @transform_0, window_bounds = array<i64: 1, 8, 32>}, {pipeline_mode = #tpu.pipeline_mode<synchronous>, transform_indices = @transform_1, window_bounds = array<i64: 1, 32>}, {pipeline_mode = #tpu.pipeline_mode<synchronous>, transform_indices = @transform_2, window_bounds = array<i64: 1, 32>}, {pipeline_mode = #tpu.pipeline_mode<synchronous>, transform_indices = @transform_3, window_bounds = array<i64: 32, 64>}, {pipeline_mode = #tpu.pipeline_mode<synchronous>, transform_indices = @transform_4, window_bounds = array<i64: 1, 64>}, {transform_indices = @transform_5, window_bounds = array<i64: 1, 4, 8, 8>}, {transform_indices = @transform_6, window_bounds = array<i64: 1, 4, 8, 8>}]} {
    %c0 = arith.constant 0 : index
    %c0_0 = arith.constant 0 : index
    %c0_1 = arith.constant 0 : index
    %0 = vector.load %arg2[%c0, %c0_0, %c0_1] : memref<1x8x32xf32, #tpu.memory_space<vmem>>, vector<1x8x32xf32>
    %1 = vector.shape_cast %0 : vector<1x8x32xf32> to vector<8x32xf32>
    %c0_2 = arith.constant 0 : index
    %c0_3 = arith.constant 0 : index
    %2 = vector.load %arg3[%c0_2, %c0_3] : memref<1x32xf32, #tpu.memory_space<vmem>>, vector<1x32xf32>
    %c0_4 = arith.constant 0 : index
    %c0_5 = arith.constant 0 : index
    %3 = vector.load %arg4[%c0_4, %c0_5] : memref<1x32xf32, #tpu.memory_space<vmem>>, vector<1x32xf32>
    %cst = arith.constant dense<0.000000e+00> : vector<8xf32>
    %4 = vector.multi_reduction <add>, %1, %cst [1] : vector<8x32xf32> to vector<8xf32>
    %5 = vector.shape_cast %4 : vector<8xf32> to vector<8x1xf32>
    %cst_6 = arith.constant 3.200000e+01 : f32
    %6 = vector.broadcast %cst_6 : f32 to vector<8x1xf32>
    %7 = arith.divf %5, %6 : vector<8x1xf32>
    %8 = vector.broadcast %7 : vector<8x1xf32> to vector<8x32xf32>
    %9 = arith.subf %1, %8 : vector<8x32xf32>
    %10 = arith.mulf %9, %9 : vector<8x32xf32>
    %cst_7 = arith.constant dense<0.000000e+00> : vector<8xf32>
    %11 = vector.multi_reduction <add>, %10, %cst_7 [1] : vector<8x32xf32> to vector<8xf32>
    %12 = vector.shape_cast %11 : vector<8xf32> to vector<8x1xf32>
    %cst_8 = arith.constant 3.200000e+01 : f32
    %13 = vector.broadcast %cst_8 : f32 to vector<8x1xf32>
    %14 = arith.divf %12, %13 : vector<8x1xf32>
    %cst_9 = arith.constant 9.99999974E-6 : f32
    %15 = vector.broadcast %cst_9 : f32 to vector<8x1xf32>
    %16 = arith.addf %14, %15 : vector<8x1xf32>
    %17 = math.rsqrt %16 : vector<8x1xf32>
    %18 = vector.broadcast %17 : vector<8x1xf32> to vector<8x32xf32>
    %19 = arith.mulf %9, %18 : vector<8x32xf32>
    %20 = vector.broadcast %2 : vector<1x32xf32> to vector<8x32xf32>
    %21 = arith.mulf %19, %20 : vector<8x32xf32>
    %22 = vector.broadcast %3 : vector<1x32xf32> to vector<8x32xf32>
    %23 = arith.addf %21, %22 : vector<8x32xf32>
    %24 = arith.truncf %23 : vector<8x32xf32> to vector<8x32xbf16>
    %c0_10 = arith.constant 0 : index
    %c0_11 = arith.constant 0 : index
    %25 = vector.load %arg5[%c0_10, %c0_11] : memref<32x64xbf16, #tpu.memory_space<vmem>>, vector<32x64xbf16>
    %cst_12 = arith.constant dense<0.000000e+00> : vector<8x64xf32>
    %26 = tpu.matmul %24, %25, %cst_12 {dimension_numbers = #tpu.dot_dimension_numbers<[1], [0], [0], [1], [0, 0, 1, 1], [], []>} : vector<8x32xbf16>, vector<32x64xbf16>, vector<8x64xf32> -> vector<8x64xf32>
    %c0_13 = arith.constant 0 : index
    %c0_14 = arith.constant 0 : index
    %27 = vector.load %arg6[%c0_13, %c0_14] : memref<1x64xf32, #tpu.memory_space<vmem>>, vector<1x64xf32>
    %28 = vector.broadcast %27 : vector<1x64xf32> to vector<8x64xf32>
    %29 = arith.addf %26, %28 : vector<8x64xf32>
    %30 = vector.extract_strided_slice %29 {offsets = [0, 0], sizes = [8, 8], strides = [1, 1]} : vector<8x64xf32> to vector<8x8xf32>
    %31 = arith.truncf %30 : vector<8x8xf32> to vector<8x8xbf16>
    %c0_15 = arith.constant 0 : index
    %c0_16 = arith.constant 0 : index
    %c0_17 = arith.constant 0 : index
    %c0_18 = arith.constant 0 : index
    %32 = vector.load %arg7[%c0_15, %c0_16, %c0_17, %c0_18] : memref<1x4x8x8xbf16, #tpu.memory_space<vmem>>, vector<1x1x8x8xbf16>
    %33 = vector.shape_cast %32 : vector<1x1x8x8xbf16> to vector<8x8xbf16>
    %34 = vector.shape_cast %31 : vector<8x8xbf16> to vector<1x1x8x8xbf16>
    tpu.vector_store %arg7[%c0_15, %c0_16, %c0_17, %c0_18], %34 {strides = array<i32>} : memref<1x4x8x8xbf16, #tpu.memory_space<vmem>>, vector<1x1x8x8xbf16>,
    %35 = vector.extract_strided_slice %29 {offsets = [0, 32], sizes = [8, 8], strides = [1, 1]} : vector<8x64xf32> to vector<8x8xf32>
    %36 = arith.truncf %35 : vector<8x8xf32> to vector<8x8xbf16>
    %c0_19 = arith.constant 0 : index
    %c0_20 = arith.constant 0 : index
    %c0_21 = arith.constant 0 : index
    %c0_22 = arith.constant 0 : index
    %37 = vector.load %arg8[%c0_19, %c0_20, %c0_21, %c0_22] : memref<1x4x8x8xbf16, #tpu.memory_space<vmem>>, vector<1x1x8x8xbf16>
    %38 = vector.shape_cast %37 : vector<1x1x8x8xbf16> to vector<8x8xbf16>
    %39 = vector.shape_cast %36 : vector<8x8xbf16> to vector<1x1x8x8xbf16>
    tpu.vector_store %arg8[%c0_19, %c0_20, %c0_21, %c0_22], %39 {strides = array<i32>} : memref<1x4x8x8xbf16, #tpu.memory_space<vmem>>, vector<1x1x8x8xbf16>,
    %40 = vector.extract_strided_slice %29 {offsets = [0, 8], sizes = [8, 8], strides = [1, 1]} : vector<8x64xf32> to vector<8x8xf32>
    %41 = arith.truncf %40 : vector<8x8xf32> to vector<8x8xbf16>
    %c0_23 = arith.constant 0 : index
    %c1 = arith.constant 1 : index
    %c0_24 = arith.constant 0 : index
    %c0_25 = arith.constant 0 : index
    %42 = vector.load %arg7[%c0_23, %c1, %c0_24, %c0_25] : memref<1x4x8x8xbf16, #tpu.memory_space<vmem>>, vector<1x1x8x8xbf16>
    %43 = vector.shape_cast %42 : vector<1x1x8x8xbf16> to vector<8x8xbf16>
    %44 = vector.shape_cast %41 : vector<8x8xbf16> to vector<1x1x8x8xbf16>
    tpu.vector_store %arg7[%c0_23, %c1, %c0_24, %c0_25], %44 {strides = array<i32>} : memref<1x4x8x8xbf16, #tpu.memory_space<vmem>>, vector<1x1x8x8xbf16>,
    %45 = vector.extract_strided_slice %29 {offsets = [0, 40], sizes = [8, 8], strides = [1, 1]} : vector<8x64xf32> to vector<8x8xf32>
    %46 = arith.truncf %45 : vector<8x8xf32> to vector<8x8xbf16>
    %c0_26 = arith.constant 0 : index
    %c1_27 = arith.constant 1 : index
    %c0_28 = arith.constant 0 : index
    %c0_29 = arith.constant 0 : index
    %47 = vector.load %arg8[%c0_26, %c1_27, %c0_28, %c0_29] : memref<1x4x8x8xbf16, #tpu.memory_space<vmem>>, vector<1x1x8x8xbf16>
    %48 = vector.shape_cast %47 : vector<1x1x8x8xbf16> to vector<8x8xbf16>
    %49 = vector.shape_cast %46 : vector<8x8xbf16> to vector<1x1x8x8xbf16>
    tpu.vector_store %arg8[%c0_26, %c1_27, %c0_28, %c0_29], %49 {strides = array<i32>} : memref<1x4x8x8xbf16, #tpu.memory_space<vmem>>, vector<1x1x8x8xbf16>,
    %50 = vector.extract_strided_slice %29 {offsets = [0, 16], sizes = [8, 8], strides = [1, 1]} : vector<8x64xf32> to vector<8x8xf32>
    %51 = arith.truncf %50 : vector<8x8xf32> to vector<8x8xbf16>
    %c0_30 = arith.constant 0 : index
    %c2 = arith.constant 2 : index
    %c0_31 = arith.constant 0 : index
    %c0_32 = arith.constant 0 : index
    %52 = vector.load %arg7[%c0_30, %c2, %c0_31, %c0_32] : memref<1x4x8x8xbf16, #tpu.memory_space<vmem>>, vector<1x1x8x8xbf16>
    %53 = vector.shape_cast %52 : vector<1x1x8x8xbf16> to vector<8x8xbf16>
    %54 = vector.shape_cast %51 : vector<8x8xbf16> to vector<1x1x8x8xbf16>
    tpu.vector_store %arg7[%c0_30, %c2, %c0_31, %c0_32], %54 {strides = array<i32>} : memref<1x4x8x8xbf16, #tpu.memory_space<vmem>>, vector<1x1x8x8xbf16>,
    %55 = vector.extract_strided_slice %29 {offsets = [0, 48], sizes = [8, 8], strides = [1, 1]} : vector<8x64xf32> to vector<8x8xf32>
    %56 = arith.truncf %55 : vector<8x8xf32> to vector<8x8xbf16>
    %c0_33 = arith.constant 0 : index
    %c2_34 = arith.constant 2 : index
    %c0_35 = arith.constant 0 : index
    %c0_36 = arith.constant 0 : index
    %57 = vector.load %arg8[%c0_33, %c2_34, %c0_35, %c0_36] : memref<1x4x8x8xbf16, #tpu.memory_space<vmem>>, vector<1x1x8x8xbf16>
    %58 = vector.shape_cast %57 : vector<1x1x8x8xbf16> to vector<8x8xbf16>
    %59 = vector.shape_cast %56 : vector<8x8xbf16> to vector<1x1x8x8xbf16>
    tpu.vector_store %arg8[%c0_33, %c2_34, %c0_35, %c0_36], %59 {strides = array<i32>} : memref<1x4x8x8xbf16, #tpu.memory_space<vmem>>, vector<1x1x8x8xbf16>,
    %60 = vector.extract_strided_slice %29 {offsets = [0, 24], sizes = [8, 8], strides = [1, 1]} : vector<8x64xf32> to vector<8x8xf32>
    %61 = arith.truncf %60 : vector<8x8xf32> to vector<8x8xbf16>
    %c0_37 = arith.constant 0 : index
    %c3 = arith.constant 3 : index
    %c0_38 = arith.constant 0 : index
    %c0_39 = arith.constant 0 : index
    %62 = vector.load %arg7[%c0_37, %c3, %c0_38, %c0_39] : memref<1x4x8x8xbf16, #tpu.memory_space<vmem>>, vector<1x1x8x8xbf16>
    %63 = vector.shape_cast %62 : vector<1x1x8x8xbf16> to vector<8x8xbf16>
    %64 = vector.shape_cast %61 : vector<8x8xbf16> to vector<1x1x8x8xbf16>
    tpu.vector_store %arg7[%c0_37, %c3, %c0_38, %c0_39], %64 {strides = array<i32>} : memref<1x4x8x8xbf16, #tpu.memory_space<vmem>>, vector<1x1x8x8xbf16>,
    %65 = vector.extract_strided_slice %29 {offsets = [0, 56], sizes = [8, 8], strides = [1, 1]} : vector<8x64xf32> to vector<8x8xf32>
    %66 = arith.truncf %65 : vector<8x8xf32> to vector<8x8xbf16>
    %c0_40 = arith.constant 0 : index
    %c3_41 = arith.constant 3 : index
    %c0_42 = arith.constant 0 : index
    %c0_43 = arith.constant 0 : index
    %67 = vector.load %arg8[%c0_40, %c3_41, %c0_42, %c0_43] : memref<1x4x8x8xbf16, #tpu.memory_space<vmem>>, vector<1x1x8x8xbf16>
    %68 = vector.shape_cast %67 : vector<1x1x8x8xbf16> to vector<8x8xbf16>
    %69 = vector.shape_cast %66 : vector<8x8xbf16> to vector<1x1x8x8xbf16>
    tpu.vector_store %arg8[%c0_40, %c3_41, %c0_42, %c0_43], %69 {strides = array<i32>} : memref<1x4x8x8xbf16, #tpu.memory_space<vmem>>, vector<1x1x8x8xbf16>,
    return
  }
  func.func @transform_0(%arg0: i32, %arg1: i32) -> (i32, i32, i32) {
    %c0_i32 = arith.constant 0 : i32
    %c0_i32_0 = arith.constant 0 : i32
    return %arg0, %arg1, %c0_i32 : i32, i32, i32
  }
  func.func @transform_1(%arg0: i32, %arg1: i32) -> (i32, i32) {
    %c0_i32 = arith.constant 0 : i32
    %c0_i32_0 = arith.constant 0 : i32
    %c0_i32_1 = arith.constant 0 : i32
    return %c0_i32, %c0_i32_0 : i32, i32
  }
  func.func @transform_2(%arg0: i32, %arg1: i32) -> (i32, i32) {
    %c0_i32 = arith.constant 0 : i32
    %c0_i32_0 = arith.constant 0 : i32
    %c0_i32_1 = arith.constant 0 : i32
    return %c0_i32, %c0_i32_0 : i32, i32
  }
  func.func @transform_3(%arg0: i32, %arg1: i32) -> (i32, i32) {
    %c0_i32 = arith.constant 0 : i32
    %c0_i32_0 = arith.constant 0 : i32
    %c0_i32_1 = arith.constant 0 : i32
    return %c0_i32, %c0_i32_0 : i32, i32
  }
  func.func @transform_4(%arg0: i32, %arg1: i32) -> (i32, i32) {
    %c0_i32 = arith.constant 0 : i32
    %c0_i32_0 = arith.constant 0 : i32
    %c0_i32_1 = arith.constant 0 : i32
    return %c0_i32, %c0_i32_0 : i32, i32
  }
  func.func @transform_5(%arg0: i32, %arg1: i32) -> (i32, i32, i32, i32) {
    %c0_i32 = arith.constant 0 : i32
    %c0_i32_0 = arith.constant 0 : i32
    %c0_i32_1 = arith.constant 0 : i32
    return %arg0, %c0_i32, %arg1, %c0_i32_0 : i32, i32, i32, i32
  }
  func.func @transform_6(%arg0: i32, %arg1: i32) -> (i32, i32, i32, i32) {
    %c0_i32 = arith.constant 0 : i32
    %c0_i32_0 = arith.constant 0 : i32
    %c0_i32_1 = arith.constant 0 : i32
    return %arg0, %c0_i32, %arg1, %c0_i32_0 : i32, i32, i32, i32
  }
}

module attributes {stable_mosaic.version = 11 : i64} {
  func.func @kernel(%arg0: i32, %arg1: i32, %arg2: memref<1x8x32xf32, #tpu.memory_space<vmem>>, %arg3: memref<1x32xf32, #tpu.memory_space<vmem>>, %arg4: memref<1x32xf32, #tpu.memory_space<vmem>>, %arg5: memref<32x64xbf16, #tpu.memory_space<vmem>>, %arg6: memref<1x64xf32, #tpu.memory_space<vmem>>, %arg7: memref<1x4x8x8xbf16, #tpu.memory_space<vmem>>, %arg8: memref<1x4x8x8xbf16, #tpu.memory_space<vmem>>) attributes {dimension_semantics = [#tpu.dimension_semantics<parallel>, #tpu.dimension_semantics<parallel>], iteration_bounds = array<i64: 2, 1>, scalar_prefetch = 0 : i64, scratch_operands = 0 : i64, tpu.core_type = #tpu.core_type<tc>, window_params = [{transform_indices = @transform_0, window_bounds = array<i64: 1, 8, 32>}, {pipeline_mode = #tpu.pipeline_mode<synchronous>, transform_indices = @transform_1, window_bounds = array<i64: 1, 32>}, {pipeline_mode = #tpu.pipeline_mode<synchronous>, transform_indices = @transform_2, window_bounds = array<i64: 1, 32>}, {pipeline_mode = #tpu.pipeline_mode<synchronous>, transform_indices = @transform_3, window_bounds = array<i64: 32, 64>}, {pipeline_mode = #tpu.pipeline_mode<synchronous>, transform_indices = @transform_4, window_bounds = array<i64: 1, 64>}, {transform_indices = @transform_5, window_bounds = array<i64: 1, 4, 8, 8>}, {transform_indices = @transform_6, window_bounds = array<i64: 1, 4, 8, 8>}]} {
    %c0 = arith.constant 0 : index
    %c0_0 = arith.constant 0 : index
    %c0_1 = arith.constant 0 : index
    %0 = vector.load %arg2[%c0, %c0_0, %c0_1] : memref<1x8x32xf32, #tpu.memory_space<vmem>>, vector<1x8x32xf32>
    %1 = vector.shape_cast %0 : vector<1x8x32xf32> to vector<8x32xf32>
    %c0_2 = arith.constant 0 : index
    %c0_3 = arith.constant 0 : index
    %2 = vector.load %arg3[%c0_2, %c0_3] : memref<1x32xf32, #tpu.memory_space<vmem>>, vector<1x32xf32>
    %c0_4 = arith.constant 0 : index
    %c0_5 = arith.constant 0 : index
    %3 = vector.load %arg4[%c0_4, %c0_5] : memref<1x32xf32, #tpu.memory_space<vmem>>, vector<1x32xf32>
    %cst = arith.constant dense<0.000000e+00> : vector<8xf32>
    %4 = vector.multi_reduction <add>, %1, %cst [1] : vector<8x32xf32> to vector<8xf32>
    %5 = vector.shape_cast %4 : vector<8xf32> to vector<8x1xf32>
    %cst_6 = arith.constant 3.200000e+01 : f32
    %6 = vector.broadcast %cst_6 : f32 to vector<8x1xf32>
    %7 = arith.divf %5, %6 : vector<8x1xf32>
    %8 = vector.broadcast %7 : vector<8x1xf32> to vector<8x32xf32>
    %9 = arith.subf %1, %8 : vector<8x32xf32>
    %10 = arith.mulf %9, %9 : vector<8x32xf32>
    %cst_7 = arith.constant dense<0.000000e+00> : vector<8xf32>
    %11 = vector.multi_reduction <add>, %10, %cst_7 [1] : vector<8x32xf32> to vector<8xf32>
    %12 = vector.shape_cast %11 : vector<8xf32> to vector<8x1xf32>
    %cst_8 = arith.constant 3.200000e+01 : f32
    %13 = vector.broadcast %cst_8 : f32 to vector<8x1xf32>
    %14 = arith.divf %12, %13 : vector<8x1xf32>
    %cst_9 = arith.constant 9.99999974E-6 : f32
    %15 = vector.broadcast %cst_9 : f32 to vector<8x1xf32>
    %16 = arith.addf %14, %15 : vector<8x1xf32>
    %17 = math.rsqrt %16 : vector<8x1xf32>
    %18 = vector.broadcast %17 : vector<8x1xf32> to vector<8x32xf32>
    %19 = arith.mulf %9, %18 : vector<8x32xf32>
    %20 = vector.broadcast %2 : vector<1x32xf32> to vector<8x32xf32>
    %21 = arith.mulf %19, %20 : vector<8x32xf32>
    %22 = vector.broadcast %3 : vector<1x32xf32> to vector<8x32xf32>
    %23 = arith.addf %21, %22 : vector<8x32xf32>
    %24 = arith.truncf %23 : vector<8x32xf32> to vector<8x32xbf16>
    %c0_10 = arith.constant 0 : index
    %c0_11 = arith.constant 0 : index
    %25 = vector.load %arg5[%c0_10, %c0_11] : memref<32x64xbf16, #tpu.memory_space<vmem>>, vector<32x64xbf16>
    %cst_12 = arith.constant dense<0.000000e+00> : vector<8x64xf32>
    %26 = tpu.matmul %24, %25, %cst_12 {dimension_numbers = #tpu.dot_dimension_numbers<[1], [0], [0], [1], [0, 0, 1, 1], [], []>} : vector<8x32xbf16>, vector<32x64xbf16>, vector<8x64xf32> -> vector<8x64xf32>
    %c0_13 = arith.constant 0 : index
    %c0_14 = arith.constant 0 : index
    %27 = vector.load %arg6[%c0_13, %c0_14] : memref<1x64xf32, #tpu.memory_space<vmem>>, vector<1x64xf32>
    %28 = vector.broadcast %27 : vector<1x64xf32> to vector<8x64xf32>
    %29 = arith.addf %26, %28 : vector<8x64xf32>
    %30 = vector.extract_strided_slice %29 {offsets = [0, 0], sizes = [8, 8], strides = [1, 1]} : vector<8x64xf32> to vector<8x8xf32>
    %31 = arith.truncf %30 : vector<8x8xf32> to vector<8x8xbf16>
    %c0_15 = arith.constant 0 : index
    %c0_16 = arith.constant 0 : index
    %c0_17 = arith.constant 0 : index
    %c0_18 = arith.constant 0 : index
    %32 = vector.load %arg7[%c0_15, %c0_16, %c0_17, %c0_18] : memref<1x4x8x8xbf16, #tpu.memory_space<vmem>>, vector<1x1x8x8xbf16>
    %33 = vector.shape_cast %32 : vector<1x1x8x8xbf16> to vector<8x8xbf16>
    %34 = vector.shape_cast %31 : vector<8x8xbf16> to vector<1x1x8x8xbf16>
    tpu.vector_store %arg7[%c0_15, %c0_16, %c0_17, %c0_18], %34 {strides = array<i32>} : memref<1x4x8x8xbf16, #tpu.memory_space<vmem>>, vector<1x1x8x8xbf16>,
    %35 = vector.extract_strided_slice %29 {offsets = [0, 32], sizes = [8, 8], strides = [1, 1]} : vector<8x64xf32> to vector<8x8xf32>
    %36 = arith.truncf %35 : vector<8x8xf32> to vector<8x8xbf16>
    %c0_19 = arith.constant 0 : index
    %c0_20 = arith.constant 0 : index
    %c0_21 = arith.constant 0 : index
    %c0_22 = arith.constant 0 : index
    %37 = vector.load %arg8[%c0_19, %c0_20, %c0_21, %c0_22] : memref<1x4x8x8xbf16, #tpu.memory_space<vmem>>, vector<1x1x8x8xbf16>
    %38 = vector.shape_cast %37 : vector<1x1x8x8xbf16> to vector<8x8xbf16>
    %39 = vector.shape_cast %36 : vector<8x8xbf16> to vector<1x1x8x8xbf16>
    tpu.vector_store %arg8[%c0_19, %c0_20, %c0_21, %c0_22], %39 {strides = array<i32>} : memref<1x4x8x8xbf16, #tpu.memory_space<vmem>>, vector<1x1x8x8xbf16>,
    %40 = vector.extract_strided_slice %29 {offsets = [0, 8], sizes = [8, 8], strides = [1, 1]} : vector<8x64xf32> to vector<8x8xf32>
    %41 = arith.truncf %40 : vector<8x8xf32> to vector<8x8xbf16>
    %c0_23 = arith.constant 0 : index
    %c1 = arith.constant 1 : index
    %c0_24 = arith.constant 0 : index
    %c0_25 = arith.constant 0 : index
    %42 = vector.load %arg7[%c0_23, %c1, %c0_24, %c0_25] : memref<1x4x8x8xbf16, #tpu.memory_space<vmem>>, vector<1x1x8x8xbf16>
    %43 = vector.shape_cast %42 : vector<1x1x8x8xbf16> to vector<8x8xbf16>
    %44 = vector.shape_cast %41 : vector<8x8xbf16> to vector<1x1x8x8xbf16>
    tpu.vector_store %arg7[%c0_23, %c1, %c0_24, %c0_25], %44 {strides = array<i32>} : memref<1x4x8x8xbf16, #tpu.memory_space<vmem>>, vector<1x1x8x8xbf16>,
    %45 = vector.extract_strided_slice %29 {offsets = [0, 40], sizes = [8, 8], strides = [1, 1]} : vector<8x64xf32> to vector<8x8xf32>
    %46 = arith.truncf %45 : vector<8x8xf32> to vector<8x8xbf16>
    %c0_26 = arith.constant 0 : index
    %c1_27 = arith.constant 1 : index
    %c0_28 = arith.constant 0 : index
    %c0_29 = arith.constant 0 : index
    %47 = vector.load %arg8[%c0_26, %c1_27, %c0_28, %c0_29] : memref<1x4x8x8xbf16, #tpu.memory_space<vmem>>, vector<1x1x8x8xbf16>
    %48 = vector.shape_cast %47 : vector<1x1x8x8xbf16> to vector<8x8xbf16>
    %49 = vector.shape_cast %46 : vector<8x8xbf16> to vector<1x1x8x8xbf16>
    tpu.vector_store %arg8[%c0_26, %c1_27, %c0_28, %c0_29], %49 {strides = array<i32>} : memref<1x4x8x8xbf16, #tpu.memory_space<vmem>>, vector<1x1x8x8xbf16>,
    %50 = vector.extract_strided_slice %29 {offsets = [0, 16], sizes = [8, 8], strides = [1, 1]} : vector<8x64xf32> to vector<8x8xf32>
    %51 = arith.truncf %50 : vector<8x8xf32> to vector<8x8xbf16>
    %c0_30 = arith.constant 0 : index
    %c2 = arith.constant 2 : index
    %c0_31 = arith.constant 0 : index
    %c0_32 = arith.constant 0 : index
    %52 = vector.load %arg7[%c0_30, %c2, %c0_31, %c0_32] : memref<1x4x8x8xbf16, #tpu.memory_space<vmem>>, vector<1x1x8x8xbf16>
    %53 = vector.shape_cast %52 : vector<1x1x8x8xbf16> to vector<8x8xbf16>
    %54 = vector.shape_cast %51 : vector<8x8xbf16> to vector<1x1x8x8xbf16>
    tpu.vector_store %arg7[%c0_30, %c2, %c0_31, %c0_32], %54 {strides = array<i32>} : memref<1x4x8x8xbf16, #tpu.memory_space<vmem>>, vector<1x1x8x8xbf16>,
    %55 = vector.extract_strided_slice %29 {offsets = [0, 48], sizes = [8, 8], strides = [1, 1]} : vector<8x64xf32> to vector<8x8xf32>
    %56 = arith.truncf %55 : vector<8x8xf32> to vector<8x8xbf16>
    %c0_33 = arith.constant 0 : index
    %c2_34 = arith.constant 2 : index
    %c0_35 = arith.constant 0 : index
    %c0_36 = arith.constant 0 : index
    %57 = vector.load %arg8[%c0_33, %c2_34, %c0_35, %c0_36] : memref<1x4x8x8xbf16, #tpu.memory_space<vmem>>, vector<1x1x8x8xbf16>
    %58 = vector.shape_cast %57 : vector<1x1x8x8xbf16> to vector<8x8xbf16>
    %59 = vector.shape_cast %56 : vector<8x8xbf16> to vector<1x1x8x8xbf16>
    tpu.vector_store %arg8[%c0_33, %c2_34, %c0_35, %c0_36], %59 {strides = array<i32>} : memref<1x4x8x8xbf16, #tpu.memory_space<vmem>>, vector<1x1x8x8xbf16>,
    %60 = vector.extract_strided_slice %29 {offsets = [0, 24], sizes = [8, 8], strides = [1, 1]} : vector<8x64xf32> to vector<8x8xf32>
    %61 = arith.truncf %60 : vector<8x8xf32> to vector<8x8xbf16>
    %c0_37 = arith.constant 0 : index
    %c3 = arith.constant 3 : index
    %c0_38 = arith.constant 0 : index
    %c0_39 = arith.constant 0 : index
    %62 = vector.load %arg7[%c0_37, %c3, %c0_38, %c0_39] : memref<1x4x8x8xbf16, #tpu.memory_space<vmem>>, vector<1x1x8x8xbf16>
    %63 = vector.shape_cast %62 : vector<1x1x8x8xbf16> to vector<8x8xbf16>
    %64 = vector.shape_cast %61 : vector<8x8xbf16> to vector<1x1x8x8xbf16>
    tpu.vector_store %arg7[%c0_37, %c3, %c0_38, %c0_39], %64 {strides = array<i32>} : memref<1x4x8x8xbf16, #tpu.memory_space<vmem>>, vector<1x1x8x8xbf16>,
    %65 = vector.extract_strided_slice %29 {offsets = [0, 56], sizes = [8, 8], strides = [1, 1]} : vector<8x64xf32> to vector<8x8xf32>
    %66 = arith.truncf %65 : vector<8x8xf32> to vector<8x8xbf16>
    %c0_40 = arith.constant 0 : index
    %c3_41 = arith.constant 3 : index
    %c0_42 = arith.constant 0 : index
    %c0_43 = arith.constant 0 : index
    %67 = vector.load %arg8[%c0_40, %c3_41, %c0_42, %c0_43] : memref<1x4x8x8xbf16, #tpu.memory_space<vmem>>, vector<1x1x8x8xbf16>
    %68 = vector.shape_cast %67 : vector<1x1x8x8xbf16> to vector<8x8xbf16>
    %69 = vector.shape_cast %66 : vector<8x8xbf16> to vector<1x1x8x8xbf16>
    tpu.vector_store %arg8[%c0_40, %c3_41, %c0_42, %c0_43], %69 {strides = array<i32>} : memref<1x4x8x8xbf16, #tpu.memory_space<vmem>>, vector<1x1x8x8xbf16>,
    return
  }
  func.func @transform_0(%arg0: i32, %arg1: i32) -> (i32, i32, i32) {
    %c0_i32 = arith.constant 0 : i32
    %c0_i32_0 = arith.constant 0 : i32
    return %arg0, %arg1, %c0_i32 : i32, i32, i32
  }
  func.func @transform_1(%arg0: i32, %arg1: i32) -> (i32, i32) {
    %c0_i32 = arith.constant 0 : i32
    %c0_i32_0 = arith.constant 0 : i32
    %c0_i32_1 = arith.constant 0 : i32
    return %c0_i32, %c0_i32_0 : i32, i32
  }
  func.func @transform_2(%arg0: i32, %arg1: i32) -> (i32, i32) {
    %c0_i32 = arith.constant 0 : i32
    %c0_i32_0 = arith.constant 0 : i32
    %c0_i32_1 = arith.constant 0 : i32
    return %c0_i32, %c0_i32_0 : i32, i32
  }
  func.func @transform_3(%arg0: i32, %arg1: i32) -> (i32, i32) {
    %c0_i32 = arith.constant 0 : i32
    %c0_i32_0 = arith.constant 0 : i32
    %c0_i32_1 = arith.constant 0 : i32
    return %c0_i32, %c0_i32_0 : i32, i32
  }
  func.func @transform_4(%arg0: i32, %arg1: i32) -> (i32, i32) {
    %c0_i32 = arith.constant 0 : i32
    %c0_i32_0 = arith.constant 0 : i32
    %c0_i32_1 = arith.constant 0 : i32
    return %c0_i32, %c0_i32_0 : i32, i32
  }
  func.func @transform_5(%arg0: i32, %arg1: i32) -> (i32, i32, i32, i32) {
    %c0_i32 = arith.constant 0 : i32
    %c0_i32_0 = arith.constant 0 : i32
    %c0_i32_1 = arith.constant 0 : i32
    return %arg0, %c0_i32, %arg1, %c0_i32_0 : i32, i32, i32, i32
  }
  func.func @transform_6(%arg0: i32, %arg1: i32) -> (i32, i32, i32, i32) {
    %c0_i32 = arith.constant 0 : i32
    %c0_i32_0 = arith.constant 0 : i32
    %c0_i32_1 = arith.constant 0 : i32
    return %arg0, %c0_i32, %arg1, %c0_i32_0 : i32, i32, i32, i32
  }
}

</mosaic_0001>

<llo_original>
// kernel: tpu_custom_call.1
$region0: #{tpu_custom_call.1}
  #allocation0 [shape = 'u32[]', space=smem, size = 0x4, offset = 0x4, fixed_abs, tag = 'smem constant byte address 0x4 - core index']
  #allocation1 [shape = 'u32[144,128]{1,0:T(1,128)}', space=vmem, size = 0x12000, scoped, tag = 'internal scratch']
  %s0 = inlined_call_operand.hbm [shape: f32[2,8,32], index: 0, kind: input, shape index: {}]
  %s1 = inlined_call_operand.vmem [shape: f32[1,32], index: 1, kind: input, shape index: {}]
  %s2 = inlined_call_operand.vmem [shape: f32[1,32], index: 2, kind: input, shape index: {}]
  %s3 = inlined_call_operand.hbm [shape: bf16[32,64], index: 3, kind: input, shape index: {}]
  %s4 = inlined_call_operand.vmem [shape: f32[1,64], index: 4, kind: input, shape index: {}]
  %s5 = inlined_call_operand.hbm [shape: bf16[2,4,8,8], index: 5, kind: output, shape index: {0}]
  %s6 = inlined_call_operand.hbm [shape: bf16[2,4,8,8], index: 6, kind: output, shape index: {1}]
  %7 = xla_tuple %s5, %s6
  %s8 = sld [smem:[#allocation0]]
  $region69: #{tpu_custom_call.1} parent=0
    _
  %s10 = ssub.s32 1, %s8
  %s11 = scalar_select 0, %s10, %s8
  $region1: #{tpu_custom_call.1} parent=0
    #allocation2 [shape = 'u8[8192]{0}', space=vmem, size = 0x2000, scoped, tag = 'input window, operand 0']
    #allocation3 [shape = 's32[2]{0}', space=sflag, size = 0x8, scoped, tag = 'scoped memory for tpu_custom_call.1']
    #allocation4 [shape = 's32[2]{0}', space=sflag, size = 0x8, scoped, tag = 'scoped memory for tpu_custom_call.1']
    #allocation5 [shape = 'u8[8192]{0}', space=vmem, size = 0x2000, scoped, tag = 'input window, operand 3, single buffered']
    #allocation6 [shape = 's32[1]{0}', space=sflag, size = 0x4, scoped, tag = 'scoped memory for tpu_custom_call.1']
    #allocation7 [shape = 'u8[16384]{0}', space=vmem, size = 0x4000, scoped, tag = 'output window, operand 0']
    #allocation8 [shape = 'u8[16384]{0}', space=vmem, size = 0x4000, scoped, tag = 'output window, operand 1']
    #allocation9 [shape = 's32[2]{0}', space=sflag, size = 0x8, scoped, tag = 'scoped memory for tpu_custom_call.1']
    %12 = vsyncpa [#allocation3], 0
    %s13 = scalar_lea.sflag [#allocation3], 1
    %14 = vsyncpa %s13, 0
    %15 = vsyncpa [#allocation6], 0
    %16 = vsyncpa [#allocation4], 0
    %s17 = scalar_lea.sflag [#allocation4], 1
    %18 = vsyncpa %s17, 0
    %19 = vsyncpa [#allocation9], 0
    %s20 = scalar_lea.sflag [#allocation9], 1
    %21 = vsyncpa %s20, 0
    loop: start=0, step=1, limit=4
    $region2: #{tpu_custom_call.1} parent=1 // loop_pre_header
      _
    $region3: #{tpu_custom_call.1} parent=1 // loop_header
      %s23 = sphi 0, %s27
      %p24 = scmp.ge.s32.totalorder %s23, 4
      %s30 = sphi 0, %s42
      %s31 = sphi 0, %s38
      %s32 = sphi 0, %s30
      %s33 = sphi 0, %s31
      %s34 = sphi 0, %s32
      %s35 = sphi 0, %s33
      %s47 = sphi 0, %s49
      %s50 = sphi 0, %s47
      %s51 = sphi 0, %s50
      %s67 = sphi 0, %s51
      %s71 = sphi 0, %s71
      %s73 = sphi 0, %s71
      %s74 = sphi 0, %s73
      %s88 = sphi 0, %s74
      %s92 = sphi 0, %s92
      %s94 = sphi 0, %s92
      %s95 = sphi 0, %s94
      %s109 = sphi 0, %s95
      %s113 = sphi 0, %s113
      %s115 = sphi 0, %s113
      %s116 = sphi 0, %s115
      %s130 = sphi 0, %s116
      %s134 = sphi 0, %s134
      %s136 = sphi 0, %s134
      %s137 = sphi 0, %s136
      %s151 = sphi 0, %s137
      %s159 = sphi 0, %s161
      %s162 = sphi 0, %s159
      %s163 = sphi 0, %s162
      %s179 = sphi 0, %s163
      %s187 = sphi 0, %s189
      %s190 = sphi 0, %s187
      %s191 = sphi 0, %s190
      %s207 = sphi 0, %s191
    $region4: #{tpu_custom_call.1} parent=1 // loop_header_branch
      %26 = sbr.rel (%p24) target = $region8
    $region5: #{tpu_custom_call.1} parent=1 // loop_body
      %s28 = ssub.s32 %s23, 1
      %s29 = ssub.s32 %s23, 2
      %s36 = sadd.s32 1, %s31
      %p37 = scmp.ge.s32.totalorder %s36, 1
      %s38 = scalar_select %p37, 0, %s36
      %s39 = sadd.s32 1, %s30
      %s40 = scalar_select %p37, %s39, %s30
      %p41 = scmp.ge.s32.totalorder %s40, 2
      %s42 = scalar_select %p41, 0, %s40
      %s43 = ssub.s32 %s30, %s42
      %s44 = ssub.s32 %s31, %s38
      %s45 = sor.u32 %s43, %s44
      %p46 = scmp.eq.s32.totalorder %s45, 0
      %s48 = sadd.s32 %s47, 1
      %s49 = scalar_select %p46, %s47, %s48
      %p52 = pneg %p46
      %p53 = scmp.eq.s32.totalorder %s23, 1
      %p54 = por %p52, %p53
      %p55 = scmp.ne.s32.totalorder %s47, %s50
      %p56 = scmp.eq.s32.totalorder %s23, 0
      %p57 = por %p55, %p56
      %p58 = scmp.ne.s32.totalorder %s47, %s50
      %p59 = scmp.eq.s32.totalorder %s28, 1
      %p60 = por %p58, %p59
      %p61 = scmp.ne.s32.totalorder %s50, %s51
      %p62 = scmp.eq.s32.totalorder %s28, 0
      %p63 = por %p61, %p62
      %p64 = scmp.ne.s32.totalorder %s50, %s51
      %p65 = scmp.eq.s32.totalorder %s29, 1
      %p66 = por %p64, %p65
      %p68 = scmp.ne.s32.totalorder %s51, %s67
      %p69 = scmp.eq.s32.totalorder %s29, 0
      %p70 = por %p68, %p69
      %s72 = sadd.s32 %s71, 1
      %p75 = scmp.eq.s32.totalorder %s23, 1
      %p76 = scmp.ne.s32.totalorder %s71, %s73
      %p77 = scmp.eq.s32.totalorder %s23, 0
      %p78 = por %p76, %p77
      %p79 = scmp.ne.s32.totalorder %s71, %s73
      %p80 = scmp.eq.s32.totalorder %s28, 1
      %p81 = por %p79, %p80
      %p82 = scmp.ne.s32.totalorder %s73, %s74
      %p83 = scmp.eq.s32.totalorder %s28, 0
      %p84 = por %p82, %p83
      %p85 = scmp.ne.s32.totalorder %s73, %s74
      %p86 = scmp.eq.s32.totalorder %s29, 1
      %p87 = por %p85, %p86
      %p89 = scmp.ne.s32.totalorder %s74, %s88
      %p90 = scmp.eq.s32.totalorder %s29, 0
      %p91 = por %p89, %p90
      %s93 = sadd.s32 %s92, 1
      %p96 = scmp.eq.s32.totalorder %s23, 1
      %p97 = scmp.ne.s32.totalorder %s92, %s94
      %p98 = scmp.eq.s32.totalorder %s23, 0
      %p99 = por %p97, %p98
      %p100 = scmp.ne.s32.totalorder %s92, %s94
      %p101 = scmp.eq.s32.totalorder %s28, 1
      %p102 = por %p100, %p101
      %p103 = scmp.ne.s32.totalorder %s94, %s95
      %p104 = scmp.eq.s32.totalorder %s28, 0
      %p105 = por %p103, %p104
      %p106 = scmp.ne.s32.totalorder %s94, %s95
      %p107 = scmp.eq.s32.totalorder %s29, 1
      %p108 = por %p106, %p107
      %p110 = scmp.ne.s32.totalorder %s95, %s109
      %p111 = scmp.eq.s32.totalorder %s29, 0
      %p112 = por %p110, %p111
      %s114 = sadd.s32 %s113, 1
      %p117 = scmp.eq.s32.totalorder %s23, 1
      %p118 = scmp.ne.s32.totalorder %s113, %s115
      %p119 = scmp.eq.s32.totalorder %s23, 0
      %p120 = por %p118, %p119
      %p121 = scmp.ne.s32.totalorder %s113, %s115
      %p122 = scmp.eq.s32.totalorder %s28, 1
      %p123 = por %p121, %p122
      %p124 = scmp.ne.s32.totalorder %s115, %s116
      %p125 = scmp.eq.s32.totalorder %s28, 0
      %p126 = por %p124, %p125
      %p127 = scmp.ne.s32.totalorder %s115, %s116
      %p128 = scmp.eq.s32.totalorder %s29, 1
      %p129 = por %p127, %p128
      %p131 = scmp.ne.s32.totalorder %s116, %s130
      %p132 = scmp.eq.s32.totalorder %s29, 0
      %p133 = por %p131, %p132
      %s135 = sadd.s32 %s134, 1
      %p138 = scmp.eq.s32.totalorder %s23, 1
      %p139 = scmp.ne.s32.totalorder %s134, %s136
      %p140 = scmp.eq.s32.totalorder %s23, 0
      %p141 = por %p139, %p140
      %p142 = scmp.ne.s32.totalorder %s134, %s136
      %p143 = scmp.eq.s32.totalorder %s28, 1
      %p144 = por %p142, %p143
      %p145 = scmp.ne.s32.totalorder %s136, %s137
      %p146 = scmp.eq.s32.totalorder %s28, 0
      %p147 = por %p145, %p146
      %p148 = scmp.ne.s32.totalorder %s136, %s137
      %p149 = scmp.eq.s32.totalorder %s29, 1
      %p150 = por %p148, %p149
      %p152 = scmp.ne.s32.totalorder %s137, %s151
      %p153 = scmp.eq.s32.totalorder %s29, 0
      %p154 = por %p152, %p153
      %s155 = ssub.s32 %s30, %s42
      %s156 = ssub.s32 %s31, %s38
      %s157 = sor.u32 %s155, %s156
      %p158 = scmp.eq.s32.totalorder %s157, 0
      %s160 = sadd.s32 %s159, 1
      %s161 = scalar_select %p158, %s159, %s160
      %p164 = pneg %p158
      %p165 = scmp.eq.s32.totalorder %s23, 1
      %p166 = por %p164, %p165
      %p167 = scmp.ne.s32.totalorder %s159, %s162
      %p168 = scmp.eq.s32.totalorder %s23, 0
      %p169 = por %p167, %p168
      %p170 = scmp.ne.s32.totalorder %s159, %s162
      %p171 = scmp.eq.s32.totalorder %s28, 1
      %p172 = por %p170, %p171
      %p173 = scmp.ne.s32.totalorder %s162, %s163
      %p174 = scmp.eq.s32.totalorder %s28, 0
      %p175 = por %p173, %p174
      %p176 = scmp.ne.s32.totalorder %s162, %s163
      %p177 = scmp.eq.s32.totalorder %s29, 1
      %p178 = por %p176, %p177
      %p180 = scmp.ne.s32.totalorder %s163, %s179
      %p181 = scmp.eq.s32.totalorder %s29, 0
      %p182 = por %p180, %p181
      %s183 = ssub.s32 %s30, %s42
      %s184 = ssub.s32 %s31, %s38
      %s185 = sor.u32 %s183, %s184
      %p186 = scmp.eq.s32.totalorder %s185, 0
      %s188 = sadd.s32 %s187, 1
      %s189 = scalar_select %p186, %s187, %s188
      %p192 = pneg %p186
      %p193 = scmp.eq.s32.totalorder %s23, 1
      %p194 = por %p192, %p193
      %p195 = scmp.ne.s32.totalorder %s187, %s190
      %p196 = scmp.eq.s32.totalorder %s23, 0
      %p197 = por %p195, %p196
      %p198 = scmp.ne.s32.totalorder %s187, %s190
      %p199 = scmp.eq.s32.totalorder %s28, 1
      %p200 = por %p198, %p199
      %p201 = scmp.ne.s32.totalorder %s190, %s191
      %p202 = scmp.eq.s32.totalorder %s28, 0
      %p203 = por %p201, %p202
      %p204 = scmp.ne.s32.totalorder %s190, %s191
      %p205 = scmp.eq.s32.totalorder %s29, 1
      %p206 = por %p204, %p205
      %p208 = scmp.ne.s32.totalorder %s191, %s207
      %p209 = scmp.eq.s32.totalorder %s29, 0
      %p210 = por %p208, %p209
      %p211 = scmp.le.s32.totalorder 1, %s23
      %p212 = scmp.lt.s32.totalorder %s23, 3
      %p213 = pnand %p211, %p212
      %p214 = pneg %p213
      // Predicated region
      $region9: #{tpu_custom_call.1} parent=5 // pred_check
        _
      $region10: #{tpu_custom_call.1} parent=5 // pred_check_branch
        %216 = sbr.rel (%p213) target = $region12
      $region11: #{tpu_custom_call.1} parent=5 // pred_region
        %s217 = ssub.s32 %s23, 1
        // Predicated region
        $region13: #{tpu_custom_call.1} parent=11 // pred_check
          %p218 = pneg %p84
        $region14: #{tpu_custom_call.1} parent=11 // pred_check_branch
          %220 = sbr.rel (%p218) target = $region16
        $region15: #{tpu_custom_call.1} parent=11 // pred_region
          _
        $region16: #{tpu_custom_call.1} parent=11 // pred_fallthru
          _
        // Predicated region
        $region17: #{tpu_custom_call.1} parent=11 // pred_check
          %p221 = pneg %p105
        $region18: #{tpu_custom_call.1} parent=11 // pred_check_branch
          %223 = sbr.rel (%p221) target = $region20
        $region19: #{tpu_custom_call.1} parent=11 // pred_region
          _
        $region20: #{tpu_custom_call.1} parent=11 // pred_fallthru
          _
        // Predicated region
        $region21: #{tpu_custom_call.1} parent=11 // pred_check
          %p224 = pneg %p126
        $region22: #{tpu_custom_call.1} parent=11 // pred_check_branch
          %226 = sbr.rel (%p224) target = $region24
        $region23: #{tpu_custom_call.1} parent=11 // pred_region
          %s228 = ssub.s32 256, 256
          %229 = vsyncadd [#allocation6], %s228
          %s230 = sshll.u32 [#allocation5], 4
          %s231 = int_to_ptr.vmem [resolvable:$true] %s230
          %236 = dma.hbm_to_vmem [thread:$0]  %s3, 256, %s231, [#allocation6], 64, 64, 4
        $region24: #{tpu_custom_call.1} parent=11 // pred_fallthru
          _
        // Predicated region
        $region25: #{tpu_custom_call.1} parent=11 // pred_check
          %p237 = pneg %p147
        $region26: #{tpu_custom_call.1} parent=11 // pred_check_branch
          %239 = sbr.rel (%p237) target = $region28
        $region27: #{tpu_custom_call.1} parent=11 // pred_region
          _
        $region28: #{tpu_custom_call.1} parent=11 // pred_fallthru
          _
      $region12: #{tpu_custom_call.1} parent=5 // pred_fallthru
        _
      %p240 = scmp.lt.s32.totalorder %s23, 2
      // Predicated region
      $region29: #{tpu_custom_call.1} parent=5 // pred_check
        %p241 = pneg %p240
      $region30: #{tpu_custom_call.1} parent=5 // pred_check_branch
        %243 = sbr.rel (%p241) target = $region32
      $region31: #{tpu_custom_call.1} parent=5 // pred_region
        // Predicated region
        $region33: #{tpu_custom_call.1} parent=31 // pred_check
          %p244 = pneg %p57
        $region34: #{tpu_custom_call.1} parent=31 // pred_check_branch
          %246 = sbr.rel (%p244) target = $region36
        $region35: #{tpu_custom_call.1} parent=31 // pred_region
          %s247 = sand.u32 %s47, 1
          %s248 = scalar_lea.sflag [#allocation3], %s247
          %s249 = sand.u32 %s47, 1
          %s250 = smul.addr %s249, 8
          %s251 = scalar_lea.vmem [#allocation2], %s250
          %s253 = ssub.s32 128, 128
          %254 = vsyncadd %s248, %s253
          %s255 = sadd.s32 %s31, %s30
          %s256 = smul.addr %s255, 128
          %s257 = scalar_lea.hbm %s0, %s256
          %s259 = sshll.u32 %s251, 4
          %s260 = int_to_ptr.vmem [resolvable:$true] %s259
          %262 = dma.hbm_to_vmem [thread:$0]  %s257, 128, %s260, %s248
        $region36: #{tpu_custom_call.1} parent=31 // pred_fallthru
          _
      $region32: #{tpu_custom_call.1} parent=5 // pred_fallthru
        _
      %p263 = scmp.le.s32.totalorder 1, %s23
      %p264 = scmp.lt.s32.totalorder %s23, 3
      %p265 = pnand %p263, %p264
      %p266 = pneg %p265
      // Predicated region
      $region37: #{tpu_custom_call.1} parent=5 // pred_check
        _
      $region38: #{tpu_custom_call.1} parent=5 // pred_check_branch
        %268 = sbr.rel (%p265) target = $region40
      $region39: #{tpu_custom_call.1} parent=5 // pred_region
        %s269 = ssub.s32 %s23, 1
        %s270 = sand.u32 %s50, 1
        %s271 = scalar_lea.sflag [#allocation3], %s270
        %s272 = sand.u32 %s50, 1
        %s273 = smul.addr %s272, 8
        %s274 = scalar_lea.vmem [#allocation2], %s273
        // Predicated region
        $region41: #{tpu_custom_call.1} parent=39 // pred_check
          %p275 = pneg %p63
        $region42: #{tpu_custom_call.1} parent=39 // pred_check_branch
          %277 = sbr.rel (%p275) target = $region44
        $region43: #{tpu_custom_call.1} parent=39 // pred_region
          %278 = dma.done %s271, 128
        $region44: #{tpu_custom_call.1} parent=39 // pred_fallthru
          _
        // Predicated region
        $region45: #{tpu_custom_call.1} parent=39 // pred_check
          %p279 = pneg %p126
        $region46: #{tpu_custom_call.1} parent=39 // pred_check_branch
          %281 = sbr.rel (%p279) target = $region48
        $region47: #{tpu_custom_call.1} parent=39 // pred_region
          %282 = dma.done [#allocation6], 256
        $region48: #{tpu_custom_call.1} parent=39 // pred_fallthru
          _
        %s283 = sand.u32 %s50, 1
        %s284 = scalar_lea.sflag [#allocation3], %s283
        %s285 = sand.u32 %s50, 1
        %s286 = smul.addr %s285, 8
        %s287 = scalar_lea.vmem [#allocation2], %s286
        %p288 = pneg %p63
        %p289 = pneg %p60
        %p290 = pneg %p84
        %p291 = pneg %p81
        %p292 = pneg %p105
        %p293 = pneg %p102
        %p294 = pneg %p126
        %p295 = pneg %p123
        %p296 = pneg %p147
        %p297 = pneg %p144
        %p298 = pneg %p175
        %p299 = pneg %p172
        %s300 = sand.u32 %s162, 1
        %s301 = scalar_lea.sflag [#allocation4], %s300
        %s302 = sand.u32 %s162, 1
        %s303 = smul.addr %s302, 16
        %s304 = scalar_lea.vmem [#allocation7], %s303
        %p305 = pneg %p203
        %p306 = pneg %p200
        %s307 = sand.u32 %s190, 1
        %s308 = scalar_lea.sflag [#allocation9], %s307
        %s309 = sand.u32 %s190, 1
        %s310 = smul.addr %s309, 16
        %s311 = scalar_lea.vmem [#allocation8], %s310
        %v313 = vld [vmem:[%s274] sm:$0xff]
        %v314 = vld [vmem:[%s1] sm:$0x1]
        %v315 = vld [vmem:[%s2] sm:$0x1]
        %vm316 = vcmask 261120
        %v317 = vsel %vm316, %v313, 0.0
        %318 = vadd.xlane.f32.xlu0 %v317
        %v319 = vpop.xlane.xlu0 %318
        %v320 = vrcp.pop 32.0
        %v321 = vmul.f32 %v319, %v320
        %v322 = vsub.f32 %v313, %v321
        %v323 = vmul.f32 %v322, %v322
        %v324 = vsel %vm316, %v323, 0.0
        %325 = vadd.xlane.f32.xlu0 %v324
        %v326 = vpop.xlane.xlu0 %325
        %v327 = vmul.f32 %v326, %v320
        %v328 = vadd.f32 %v327, 1e-05
        %v329 = vrsqrt.pop %v328
        %v330 = vmul.f32 %v322, %v329
        %v332 = vlaneseq
        %v333 = vshrl.u32 %v332, 7
        %v334 = vsub.s32 0, %v333
        %v335 = vrot.slane %v314, %v334
        %v337 = vmul.f32 %v330, %v335
        %v339 = vlaneseq
        %v340 = vshrl.u32 %v339, 7
        %v341 = vsub.s32 0, %v340
        %v342 = vrot.slane %v315, %v341
        %v344 = vadd.f32 %v337, %v342
        %v345 = vpack.c.bf16 %v344, %v344
        %v346 = vld [vmem:[#allocation5] sm:$0xf]
        %v347 = vld [vmem:[#allocation5 + $0x4] sm:$0xf]
        %v348 = vld [vmem:[#allocation5 + $0x8] sm:$0xf]
        %v349 = vld [vmem:[#allocation5 + $0xc] sm:$0xf]
        %v350 = vld [vmem:[%s4] sm:$0x1]
        %v352 = vlaneseq
        %v353 = vshrl.u32 %v352, 7
        %v354 = vsub.s32 0, %v353
        %v355 = vrot.slane %v350, %v354
        %v361 = vunpack.c.l.b16 %v346
        %v362 = vunpack.c.l.b16 %v347
        %v363 = vunpack.c.l.b16 %v348
        %v364 = vunpack.c.l.b16 %v349
        %v365 = vpack.c.b16 %v362, %v361
        %v366 = vpack.c.b16 %v364, %v363
        %v370 = vsel %vm316, %v345, 0
        %372 = vmatprep.subr.bf16.mxu0 0
        %373 = vmatpush1.bf16.msra.mxu0 %v365
        %374 = vmatprep.subr.bf16.mxu0 0
        %375 = vmatpush1.bf16.msra.mxu0 %v366
        %376 = vmatprep.subr.bf16.mxu0 0
        %377 = vmatpush1.bf16.msra.mxu0 0
        %378 = vmatprep.subr.bf16.mxu0 0
        %379 = vmatpush1.bf16.msra.mxu0 0
        %380 = vmatprep.subr.bf16.mxu0 0
        %381 = vmatpush1.bf16.msra.mxu0 0
        %382 = vmatprep.subr.bf16.mxu0 0
        %383 = vmatpush1.bf16.msra.mxu0 0
        %384 = vmatprep.subr.bf16.mxu0 0
        %385 = vmatpush1.bf16.msra.mxu0 0
        %386 = vmatprep.subr.bf16.mxu0 0
        %387 = vmatpush1.bf16.msra.mxu0 0
        %388 = vmatprep.subr.bf16.mxu0 0
        %389 = vmatpush1.bf16.msra.mxu0 0
        %390 = vmatprep.subr.bf16.mxu0 0
        %391 = vmatpush1.bf16.msra.mxu0 0
        %392 = vmatprep.subr.bf16.mxu0 0
        %393 = vmatpush1.bf16.msra.mxu0 0
        %394 = vmatprep.subr.bf16.mxu0 0
        %395 = vmatpush1.bf16.msra.mxu0 0
        %396 = vmatprep.subr.bf16.mxu0 0
        %397 = vmatpush1.bf16.msra.mxu0 0
        %398 = vmatprep.subr.bf16.mxu0 0
        %399 = vmatpush1.bf16.msra.mxu0 0
        %400 = vmatprep.subr.bf16.mxu0 0
        %401 = vmatpush1.bf16.msra.mxu0 0
        %402 = vmatprep.subr.bf16.mxu0 0
        %403 = vmatpush1.bf16.msra.mxu0 0
        %404 = vmatprep.mubr.bf16.mxu0 0
        %405 = vmatmul.mubr.bf16.gmra.mrb[0].mxu0 %v370
        %v406 = vpop.f32.mrb[0].mxu0
        %v407 = vadd.f32 %v355, %v406
        %v408 = vpop.f32.mrb[0].mxu0
        %v409 = vpop.f32.mrb[0].mxu0
        %v410 = vpop.f32.mrb[0].mxu0
        %411 = vdwg.mxu0
        %v412 = vpack.c.bf16 %v407, %v407
        %vm413 = vcmask 60416
        %414 = vst.msk [vmem:[%s304] sm:$0xf] %vm413, %v412
        %v416 = vunpack.c.l.b16 %v412
        %v417 = vpack.c.b16 %v416, %v416
        %418 = vrot.lane.b32.xlu0 %v417, 96
        %v419 = vpop.permute.xlu0 %418
        %421 = vst.msk [vmem:[%s311] sm:$0xf] %vm413, %v419
        %422 = vrot.lane.b32.xlu0 %v417, 120
        %v423 = vpop.permute.xlu0 %422
        %s425 = scalar_lea.vmem %s304, 4 [#allocation7]
        %426 = vst.msk [vmem:[%s425] sm:$0xf] %vm413, %v423
        %427 = vrot.lane.b32.xlu0 %v417, 88
        %v428 = vpop.permute.xlu0 %427
        %s430 = scalar_lea.vmem %s311, 4 [#allocation8]
        %431 = vst.msk [vmem:[%s430] sm:$0xf] %vm413, %v428
        %432 = vrot.lane.b32.xlu0 %v417, 112
        %v433 = vpop.permute.xlu0 %432
        %s435 = scalar_lea.vmem %s304, 8 [#allocation7]
        %436 = vst.msk [vmem:[%s435] sm:$0xf] %vm413, %v433
        %437 = vrot.lane.b32.xlu0 %v417, 80
        %v438 = vpop.permute.xlu0 %437
        %s440 = scalar_lea.vmem %s311, 8 [#allocation8]
        %441 = vst.msk [vmem:[%s440] sm:$0xf] %vm413, %v438
        %442 = vrot.lane.b32.xlu0 %v417, 104
        %v443 = vpop.permute.xlu0 %442
        %s445 = scalar_lea.vmem %s304, 12 [#allocation7]
        %446 = vst.msk [vmem:[%s445] sm:$0xf] %vm413, %v443
        %447 = vrot.lane.b32.xlu0 %v417, 72
        %v448 = vpop.permute.xlu0 %447
        %s450 = scalar_lea.vmem %s311, 12 [#allocation8]
        %451 = vst.msk [vmem:[%s450] sm:$0xf] %vm413, %v448
        %s452 = sand.u32 %s162, 1
        %s453 = scalar_lea.sflag [#allocation4], %s452
        %s454 = sand.u32 %s162, 1
        %s455 = smul.addr %s454, 16
        %s456 = scalar_lea.vmem [#allocation7], %s455
        %s457 = sand.u32 %s190, 1
        %s458 = scalar_lea.sflag [#allocation9], %s457
        %s459 = sand.u32 %s190, 1
        %s460 = smul.addr %s459, 16
        %s461 = scalar_lea.vmem [#allocation8], %s460
        // Predicated region
        $region49: #{tpu_custom_call.1} parent=39 // pred_check
          %p462 = pneg %p172
        $region50: #{tpu_custom_call.1} parent=39 // pred_check_branch
          %464 = sbr.rel (%p462) target = $region52
        $region51: #{tpu_custom_call.1} parent=39 // pred_region
          %s466 = ssub.s32 256, 256
          %467 = vsyncadd %s453, %s466
          %s468 = smul.addr %s32, 4
          %s469 = sadd.s32 %s33, %s468
          %s470 = smul.addr %s469, 64
          %s471 = scalar_lea.hbm %s5, %s470
          %s472 = sshll.u32 %s456, 4
          %s473 = int_to_ptr.vmem [resolvable:$true] %s472
          %478 = dma.vmem_to_hbm [thread:$0]  %s473, 256, %s471, %s453, 64, 64, 4
        $region52: #{tpu_custom_call.1} parent=39 // pred_fallthru
          _
        // Predicated region
        $region53: #{tpu_custom_call.1} parent=39 // pred_check
          %p479 = pneg %p200
        $region54: #{tpu_custom_call.1} parent=39 // pred_check_branch
          %481 = sbr.rel (%p479) target = $region56
        $region55: #{tpu_custom_call.1} parent=39 // pred_region
          %s483 = ssub.s32 256, 256
          %484 = vsyncadd %s458, %s483
          %s485 = smul.addr %s32, 4
          %s486 = sadd.s32 %s33, %s485
          %s487 = smul.addr %s486, 64
          %s488 = scalar_lea.hbm %s6, %s487
          %s489 = sshll.u32 %s461, 4
          %s490 = int_to_ptr.vmem [resolvable:$true] %s489
          %495 = dma.vmem_to_hbm [thread:$0]  %s490, 256, %s488, %s458, 64, 64, 4
        $region56: #{tpu_custom_call.1} parent=39 // pred_fallthru
          _
      $region40: #{tpu_custom_call.1} parent=5 // pred_fallthru
        _
      %p496 = scmp.le.s32.totalorder 2, %s23
      // Predicated region
      $region57: #{tpu_custom_call.1} parent=5 // pred_check
        %p497 = pneg %p496
      $region58: #{tpu_custom_call.1} parent=5 // pred_check_branch
        %499 = sbr.rel (%p497) target = $region60
      $region59: #{tpu_custom_call.1} parent=5 // pred_region
        %s500 = ssub.s32 %s23, 2
        // Predicated region
        $region61: #{tpu_custom_call.1} parent=59 // pred_check
          %p501 = pneg %p178
        $region62: #{tpu_custom_call.1} parent=59 // pred_check_branch
          %503 = sbr.rel (%p501) target = $region64
        $region63: #{tpu_custom_call.1} parent=59 // pred_region
          %s504 = sand.u32 %s163, 1
          %s505 = scalar_lea.sflag [#allocation4], %s504
          %s506 = sand.u32 %s163, 1
          %s507 = smul.addr %s506, 16
          %s508 = scalar_lea.vmem [#allocation7], %s507
          %509 = dma.done %s505, 256
        $region64: #{tpu_custom_call.1} parent=59 // pred_fallthru
          _
        // Predicated region
        $region65: #{tpu_custom_call.1} parent=59 // pred_check
          %p510 = pneg %p206
        $region66: #{tpu_custom_call.1} parent=59 // pred_check_branch
          %512 = sbr.rel (%p510) target = $region68
        $region67: #{tpu_custom_call.1} parent=59 // pred_region
          %s513 = sand.u32 %s191, 1
          %s514 = scalar_lea.sflag [#allocation9], %s513
          %s515 = sand.u32 %s191, 1
          %s516 = smul.addr %s515, 16
          %s517 = scalar_lea.vmem [#allocation8], %s516
          %518 = dma.done %s514, 256
        $region68: #{tpu_custom_call.1} parent=59 // pred_fallthru
          _
      $region60: #{tpu_custom_call.1} parent=5 // pred_fallthru
        _
    $region6: #{tpu_custom_call.1} parent=1 // loop_footer
      %s27 = sadd.s32 1, %s23
    $region7: #{tpu_custom_call.1} parent=1 // loop_footer_branch
      %22 = sbr.rel target = $region3
    $region8: #{tpu_custom_call.1} parent=1 // loop_exit
      _
    %519 = vsyncpa [#allocation3], 1
    %s520 = scalar_lea.sflag [#allocation3], 1
    %521 = vsyncpa %s520, 1
    %522 = vsyncpa [#allocation6], 1
    %523 = vsyncpa [#allocation4], 1
    %s524 = scalar_lea.sflag [#allocation4], 1
    %525 = vsyncpa %s524, 1
    %526 = vsyncpa [#allocation9], 1
    %s527 = scalar_lea.sflag [#allocation9], 1
    %528 = vsyncpa %s527, 1

// kernel: tpu_custom_call.1
$region0: #{tpu_custom_call.1}
  #allocation0 [shape = 'u32[]', space=smem, size = 0x4, offset = 0x4, fixed_abs, tag = 'smem constant byte address 0x4 - core index']
  #allocation1 [shape = 'u32[144,128]{1,0:T(1,128)}', space=vmem, size = 0x12000, scoped, tag = 'internal scratch']
  %s0 = inlined_call_operand.hbm [shape: f32[2,8,32], index: 0, kind: input, shape index: {}]
  %s1 = inlined_call_operand.vmem [shape: f32[1,32], index: 1, kind: input, shape index: {}]
  %s2 = inlined_call_operand.vmem [shape: f32[1,32], index: 2, kind: input, shape index: {}]
  %s3 = inlined_call_operand.hbm [shape: bf16[32,64], index: 3, kind: input, shape index: {}]
  %s4 = inlined_call_operand.vmem [shape: f32[1,64], index: 4, kind: input, shape index: {}]
  %s5 = inlined_call_operand.hbm [shape: bf16[2,4,8,8], index: 5, kind: output, shape index: {0}]
  %s6 = inlined_call_operand.hbm [shape: bf16[2,4,8,8], index: 6, kind: output, shape index: {1}]
  %7 = xla_tuple %s5, %s6
  %s8 = sld [smem:[#allocation0]]
  $region69: #{tpu_custom_call.1} parent=0
    _
  %s10 = ssub.s32 1, %s8
  %s11 = scalar_select 0, %s10, %s8
  $region1: #{tpu_custom_call.1} parent=0
    #allocation2 [shape = 'u8[8192]{0}', space=vmem, size = 0x2000, scoped, tag = 'input window, operand 0']
    #allocation3 [shape = 's32[2]{0}', space=sflag, size = 0x8, scoped, tag = 'scoped memory for tpu_custom_call.1']
    #allocation4 [shape = 's32[2]{0}', space=sflag, size = 0x8, scoped, tag = 'scoped memory for tpu_custom_call.1']
    #allocation5 [shape = 'u8[8192]{0}', space=vmem, size = 0x2000, scoped, tag = 'input window, operand 3, single buffered']
    #allocation6 [shape = 's32[1]{0}', space=sflag, size = 0x4, scoped, tag = 'scoped memory for tpu_custom_call.1']
    #allocation7 [shape = 'u8[16384]{0}', space=vmem, size = 0x4000, scoped, tag = 'output window, operand 0']
    #allocation8 [shape = 'u8[16384]{0}', space=vmem, size = 0x4000, scoped, tag = 'output window, operand 1']
    #allocation9 [shape = 's32[2]{0}', space=sflag, size = 0x8, scoped, tag = 'scoped memory for tpu_custom_call.1']
    %12 = vsyncpa [#allocation3], 0
    %s13 = scalar_lea.sflag [#allocation3], 1
    %14 = vsyncpa %s13, 0
    %15 = vsyncpa [#allocation6], 0
    %16 = vsyncpa [#allocation4], 0
    %s17 = scalar_lea.sflag [#allocation4], 1
    %18 = vsyncpa %s17, 0
    %19 = vsyncpa [#allocation9], 0
    %s20 = scalar_lea.sflag [#allocation9], 1
    %21 = vsyncpa %s20, 0
    loop: start=0, step=1, limit=4
    $region2: #{tpu_custom_call.1} parent=1 // loop_pre_header
      _
    $region3: #{tpu_custom_call.1} parent=1 // loop_header
      %s23 = sphi 0, %s27
      %p24 = scmp.ge.s32.totalorder %s23, 4
      %s30 = sphi 0, %s42
      %s31 = sphi 0, %s38
      %s32 = sphi 0, %s30
      %s33 = sphi 0, %s31
      %s34 = sphi 0, %s32
      %s35 = sphi 0, %s33
      %s47 = sphi 0, %s49
      %s50 = sphi 0, %s47
      %s51 = sphi 0, %s50
      %s67 = sphi 0, %s51
      %s71 = sphi 0, %s71
      %s73 = sphi 0, %s71
      %s74 = sphi 0, %s73
      %s88 = sphi 0, %s74
      %s92 = sphi 0, %s92
      %s94 = sphi 0, %s92
      %s95 = sphi 0, %s94
      %s109 = sphi 0, %s95
      %s113 = sphi 0, %s113
      %s115 = sphi 0, %s113
      %s116 = sphi 0, %s115
      %s130 = sphi 0, %s116
      %s134 = sphi 0, %s134
      %s136 = sphi 0, %s134
      %s137 = sphi 0, %s136
      %s151 = sphi 0, %s137
      %s159 = sphi 0, %s161
      %s162 = sphi 0, %s159
      %s163 = sphi 0, %s162
      %s179 = sphi 0, %s163
      %s187 = sphi 0, %s189
      %s190 = sphi 0, %s187
      %s191 = sphi 0, %s190
      %s207 = sphi 0, %s191
    $region4: #{tpu_custom_call.1} parent=1 // loop_header_branch
      %26 = sbr.rel (%p24) target = $region8
    $region5: #{tpu_custom_call.1} parent=1 // loop_body
      %s28 = ssub.s32 %s23, 1
      %s29 = ssub.s32 %s23, 2
      %s36 = sadd.s32 1, %s31
      %p37 = scmp.ge.s32.totalorder %s36, 1
      %s38 = scalar_select %p37, 0, %s36
      %s39 = sadd.s32 1, %s30
      %s40 = scalar_select %p37, %s39, %s30
      %p41 = scmp.ge.s32.totalorder %s40, 2
      %s42 = scalar_select %p41, 0, %s40
      %s43 = ssub.s32 %s30, %s42
      %s44 = ssub.s32 %s31, %s38
      %s45 = sor.u32 %s43, %s44
      %p46 = scmp.eq.s32.totalorder %s45, 0
      %s48 = sadd.s32 %s47, 1
      %s49 = scalar_select %p46, %s47, %s48
      %p52 = pneg %p46
      %p53 = scmp.eq.s32.totalorder %s23, 1
      %p54 = por %p52, %p53
      %p55 = scmp.ne.s32.totalorder %s47, %s50
      %p56 = scmp.eq.s32.totalorder %s23, 0
      %p57 = por %p55, %p56
      %p58 = scmp.ne.s32.totalorder %s47, %s50
      %p59 = scmp.eq.s32.totalorder %s28, 1
      %p60 = por %p58, %p59
      %p61 = scmp.ne.s32.totalorder %s50, %s51
      %p62 = scmp.eq.s32.totalorder %s28, 0
      %p63 = por %p61, %p62
      %p64 = scmp.ne.s32.totalorder %s50, %s51
      %p65 = scmp.eq.s32.totalorder %s29, 1
      %p66 = por %p64, %p65
      %p68 = scmp.ne.s32.totalorder %s51, %s67
      %p69 = scmp.eq.s32.totalorder %s29, 0
      %p70 = por %p68, %p69
      %s72 = sadd.s32 %s71, 1
      %p75 = scmp.eq.s32.totalorder %s23, 1
      %p76 = scmp.ne.s32.totalorder %s71, %s73
      %p77 = scmp.eq.s32.totalorder %s23, 0
      %p78 = por %p76, %p77
      %p79 = scmp.ne.s32.totalorder %s71, %s73
      %p80 = scmp.eq.s32.totalorder %s28, 1
      %p81 = por %p79, %p80
      %p82 = scmp.ne.s32.totalorder %s73, %s74
      %p83 = scmp.eq.s32.totalorder %s28, 0
      %p84 = por %p82, %p83
      %p85 = scmp.ne.s32.totalorder %s73, %s74
      %p86 = scmp.eq.s32.totalorder %s29, 1
      %p87 = por %p85, %p86
      %p89 = scmp.ne.s32.totalorder %s74, %s88
      %p90 = scmp.eq.s32.totalorder %s29, 0
      %p91 = por %p89, %p90
      %s93 = sadd.s32 %s92, 1
      %p96 = scmp.eq.s32.totalorder %s23, 1
      %p97 = scmp.ne.s32.totalorder %s92, %s94
      %p98 = scmp.eq.s32.totalorder %s23, 0
      %p99 = por %p97, %p98
      %p100 = scmp.ne.s32.totalorder %s92, %s94
      %p101 = scmp.eq.s32.totalorder %s28, 1
      %p102 = por %p100, %p101
      %p103 = scmp.ne.s32.totalorder %s94, %s95
      %p104 = scmp.eq.s32.totalorder %s28, 0
      %p105 = por %p103, %p104
      %p106 = scmp.ne.s32.totalorder %s94, %s95
      %p107 = scmp.eq.s32.totalorder %s29, 1
      %p108 = por %p106, %p107
      %p110 = scmp.ne.s32.totalorder %s95, %s109
      %p111 = scmp.eq.s32.totalorder %s29, 0
      %p112 = por %p110, %p111
      %s114 = sadd.s32 %s113, 1
      %p117 = scmp.eq.s32.totalorder %s23, 1
      %p118 = scmp.ne.s32.totalorder %s113, %s115
      %p119 = scmp.eq.s32.totalorder %s23, 0
      %p120 = por %p118, %p119
      %p121 = scmp.ne.s32.totalorder %s113, %s115
      %p122 = scmp.eq.s32.totalorder %s28, 1
      %p123 = por %p121, %p122
      %p124 = scmp.ne.s32.totalorder %s115, %s116
      %p125 = scmp.eq.s32.totalorder %s28, 0
      %p126 = por %p124, %p125
      %p127 = scmp.ne.s32.totalorder %s115, %s116
      %p128 = scmp.eq.s32.totalorder %s29, 1
      %p129 = por %p127, %p128
      %p131 = scmp.ne.s32.totalorder %s116, %s130
      %p132 = scmp.eq.s32.totalorder %s29, 0
      %p133 = por %p131, %p132
      %s135 = sadd.s32 %s134, 1
      %p138 = scmp.eq.s32.totalorder %s23, 1
      %p139 = scmp.ne.s32.totalorder %s134, %s136
      %p140 = scmp.eq.s32.totalorder %s23, 0
      %p141 = por %p139, %p140
      %p142 = scmp.ne.s32.totalorder %s134, %s136
      %p143 = scmp.eq.s32.totalorder %s28, 1
      %p144 = por %p142, %p143
      %p145 = scmp.ne.s32.totalorder %s136, %s137
      %p146 = scmp.eq.s32.totalorder %s28, 0
      %p147 = por %p145, %p146
      %p148 = scmp.ne.s32.totalorder %s136, %s137
      %p149 = scmp.eq.s32.totalorder %s29, 1
      %p150 = por %p148, %p149
      %p152 = scmp.ne.s32.totalorder %s137, %s151
      %p153 = scmp.eq.s32.totalorder %s29, 0
      %p154 = por %p152, %p153
      %s155 = ssub.s32 %s30, %s42
      %s156 = ssub.s32 %s31, %s38
      %s157 = sor.u32 %s155, %s156
      %p158 = scmp.eq.s32.totalorder %s157, 0
      %s160 = sadd.s32 %s159, 1
      %s161 = scalar_select %p158, %s159, %s160
      %p164 = pneg %p158
      %p165 = scmp.eq.s32.totalorder %s23, 1
      %p166 = por %p164, %p165
      %p167 = scmp.ne.s32.totalorder %s159, %s162
      %p168 = scmp.eq.s32.totalorder %s23, 0
      %p169 = por %p167, %p168
      %p170 = scmp.ne.s32.totalorder %s159, %s162
      %p171 = scmp.eq.s32.totalorder %s28, 1
      %p172 = por %p170, %p171
      %p173 = scmp.ne.s32.totalorder %s162, %s163
      %p174 = scmp.eq.s32.totalorder %s28, 0
      %p175 = por %p173, %p174
      %p176 = scmp.ne.s32.totalorder %s162, %s163
      %p177 = scmp.eq.s32.totalorder %s29, 1
      %p178 = por %p176, %p177
      %p180 = scmp.ne.s32.totalorder %s163, %s179
      %p181 = scmp.eq.s32.totalorder %s29, 0
      %p182 = por %p180, %p181
      %s183 = ssub.s32 %s30, %s42
      %s184 = ssub.s32 %s31, %s38
      %s185 = sor.u32 %s183, %s184
      %p186 = scmp.eq.s32.totalorder %s185, 0
      %s188 = sadd.s32 %s187, 1
      %s189 = scalar_select %p186, %s187, %s188
      %p192 = pneg %p186
      %p193 = scmp.eq.s32.totalorder %s23, 1
      %p194 = por %p192, %p193
      %p195 = scmp.ne.s32.totalorder %s187, %s190
      %p196 = scmp.eq.s32.totalorder %s23, 0
      %p197 = por %p195, %p196
      %p198 = scmp.ne.s32.totalorder %s187, %s190
      %p199 = scmp.eq.s32.totalorder %s28, 1
      %p200 = por %p198, %p199
      %p201 = scmp.ne.s32.totalorder %s190, %s191
      %p202 = scmp.eq.s32.totalorder %s28, 0
      %p203 = por %p201, %p202
      %p204 = scmp.ne.s32.totalorder %s190, %s191
      %p205 = scmp.eq.s32.totalorder %s29, 1
      %p206 = por %p204, %p205
      %p208 = scmp.ne.s32.totalorder %s191, %s207
      %p209 = scmp.eq.s32.totalorder %s29, 0
      %p210 = por %p208, %p209
      %p211 = scmp.le.s32.totalorder 1, %s23
      %p212 = scmp.lt.s32.totalorder %s23, 3
      %p213 = pnand %p211, %p212
      %p214 = pneg %p213
      // Predicated region
      $region9: #{tpu_custom_call.1} parent=5 // pred_check
        _
      $region10: #{tpu_custom_call.1} parent=5 // pred_check_branch
        %216 = sbr.rel (%p213) target = $region12
      $region11: #{tpu_custom_call.1} parent=5 // pred_region
        %s217 = ssub.s32 %s23, 1
        // Predicated region
        $region13: #{tpu_custom_call.1} parent=11 // pred_check
          %p218 = pneg %p84
        $region14: #{tpu_custom_call.1} parent=11 // pred_check_branch
          %220 = sbr.rel (%p218) target = $region16
        $region15: #{tpu_custom_call.1} parent=11 // pred_region
          _
        $region16: #{tpu_custom_call.1} parent=11 // pred_fallthru
          _
        // Predicated region
        $region17: #{tpu_custom_call.1} parent=11 // pred_check
          %p221 = pneg %p105
        $region18: #{tpu_custom_call.1} parent=11 // pred_check_branch
          %223 = sbr.rel (%p221) target = $region20
        $region19: #{tpu_custom_call.1} parent=11 // pred_region
          _
        $region20: #{tpu_custom_call.1} parent=11 // pred_fallthru
          _
        // Predicated region
        $region21: #{tpu_custom_call.1} parent=11 // pred_check
          %p224 = pneg %p126
        $region22: #{tpu_custom_call.1} parent=11 // pred_check_branch
          %226 = sbr.rel (%p224) target = $region24
        $region23: #{tpu_custom_call.1} parent=11 // pred_region
          %s228 = ssub.s32 256, 256
          %229 = vsyncadd [#allocation6], %s228
          %s230 = sshll.u32 [#allocation5], 4
          %s231 = int_to_ptr.vmem [resolvable:$true] %s230
          %236 = dma.hbm_to_vmem [thread:$0]  %s3, 256, %s231, [#allocation6], 64, 64, 4
        $region24: #{tpu_custom_call.1} parent=11 // pred_fallthru
          _
        // Predicated region
        $region25: #{tpu_custom_call.1} parent=11 // pred_check
          %p237 = pneg %p147
        $region26: #{tpu_custom_call.1} parent=11 // pred_check_branch
          %239 = sbr.rel (%p237) target = $region28
        $region27: #{tpu_custom_call.1} parent=11 // pred_region
          _
        $region28: #{tpu_custom_call.1} parent=11 // pred_fallthru
          _
      $region12: #{tpu_custom_call.1} parent=5 // pred_fallthru
        _
      %p240 = scmp.lt.s32.totalorder %s23, 2
      // Predicated region
      $region29: #{tpu_custom_call.1} parent=5 // pred_check
        %p241 = pneg %p240
      $region30: #{tpu_custom_call.1} parent=5 // pred_check_branch
        %243 = sbr.rel (%p241) target = $region32
      $region31: #{tpu_custom_call.1} parent=5 // pred_region
        // Predicated region
        $region33: #{tpu_custom_call.1} parent=31 // pred_check
          %p244 = pneg %p57
        $region34: #{tpu_custom_call.1} parent=31 // pred_check_branch
          %246 = sbr.rel (%p244) target = $region36
        $region35: #{tpu_custom_call.1} parent=31 // pred_region
          %s247 = sand.u32 %s47, 1
          %s248 = scalar_lea.sflag [#allocation3], %s247
          %s249 = sand.u32 %s47, 1
          %s250 = smul.addr %s249, 8
          %s251 = scalar_lea.vmem [#allocation2], %s250
          %s253 = ssub.s32 128, 128
          %254 = vsyncadd %s248, %s253
          %s255 = sadd.s32 %s31, %s30
          %s256 = smul.addr %s255, 128
          %s257 = scalar_lea.hbm %s0, %s256
          %s259 = sshll.u32 %s251, 4
          %s260 = int_to_ptr.vmem [resolvable:$true] %s259
          %262 = dma.hbm_to_vmem [thread:$0]  %s257, 128, %s260, %s248
        $region36: #{tpu_custom_call.1} parent=31 // pred_fallthru
          _
      $region32: #{tpu_custom_call.1} parent=5 // pred_fallthru
        _
      %p263 = scmp.le.s32.totalorder 1, %s23
      %p264 = scmp.lt.s32.totalorder %s23, 3
      %p265 = pnand %p263, %p264
      %p266 = pneg %p265
      // Predicated region
      $region37: #{tpu_custom_call.1} parent=5 // pred_check
        _
      $region38: #{tpu_custom_call.1} parent=5 // pred_check_branch
        %268 = sbr.rel (%p265) target = $region40
      $region39: #{tpu_custom_call.1} parent=5 // pred_region
        %s269 = ssub.s32 %s23, 1
        %s270 = sand.u32 %s50, 1
        %s271 = scalar_lea.sflag [#allocation3], %s270
        %s272 = sand.u32 %s50, 1
        %s273 = smul.addr %s272, 8
        %s274 = scalar_lea.vmem [#allocation2], %s273
        // Predicated region
        $region41: #{tpu_custom_call.1} parent=39 // pred_check
          %p275 = pneg %p63
        $region42: #{tpu_custom_call.1} parent=39 // pred_check_branch
          %277 = sbr.rel (%p275) target = $region44
        $region43: #{tpu_custom_call.1} parent=39 // pred_region
          %278 = dma.done %s271, 128
        $region44: #{tpu_custom_call.1} parent=39 // pred_fallthru
          _
        // Predicated region
        $region45: #{tpu_custom_call.1} parent=39 // pred_check
          %p279 = pneg %p126
        $region46: #{tpu_custom_call.1} parent=39 // pred_check_branch
          %281 = sbr.rel (%p279) target = $region48
        $region47: #{tpu_custom_call.1} parent=39 // pred_region
          %282 = dma.done [#allocation6], 256
        $region48: #{tpu_custom_call.1} parent=39 // pred_fallthru
          _
        %s283 = sand.u32 %s50, 1
        %s284 = scalar_lea.sflag [#allocation3], %s283
        %s285 = sand.u32 %s50, 1
        %s286 = smul.addr %s285, 8
        %s287 = scalar_lea.vmem [#allocation2], %s286
        %p288 = pneg %p63
        %p289 = pneg %p60
        %p290 = pneg %p84
        %p291 = pneg %p81
        %p292 = pneg %p105
        %p293 = pneg %p102
        %p294 = pneg %p126
        %p295 = pneg %p123
        %p296 = pneg %p147
        %p297 = pneg %p144
        %p298 = pneg %p175
        %p299 = pneg %p172
        %s300 = sand.u32 %s162, 1
        %s301 = scalar_lea.sflag [#allocation4], %s300
        %s302 = sand.u32 %s162, 1
        %s303 = smul.addr %s302, 16
        %s304 = scalar_lea.vmem [#allocation7], %s303
        %p305 = pneg %p203
        %p306 = pneg %p200
        %s307 = sand.u32 %s190, 1
        %s308 = scalar_lea.sflag [#allocation9], %s307
        %s309 = sand.u32 %s190, 1
        %s310 = smul.addr %s309, 16
        %s311 = scalar_lea.vmem [#allocation8], %s310
        %v313 = vld [vmem:[%s274] sm:$0xff]
        %v314 = vld [vmem:[%s1] sm:$0x1]
        %v315 = vld [vmem:[%s2] sm:$0x1]
        %vm316 = vcmask 261120
        %v317 = vsel %vm316, %v313, 0.0
        %318 = vadd.xlane.f32.xlu0 %v317
        %v319 = vpop.xlane.xlu0 %318
        %v320 = vrcp.pop 32.0
        %v321 = vmul.f32 %v319, %v320
        %v322 = vsub.f32 %v313, %v321
        %v323 = vmul.f32 %v322, %v322
        %v324 = vsel %vm316, %v323, 0.0
        %325 = vadd.xlane.f32.xlu0 %v324
        %v326 = vpop.xlane.xlu0 %325
        %v327 = vmul.f32 %v326, %v320
        %v328 = vadd.f32 %v327, 1e-05
        %v329 = vrsqrt.pop %v328
        %v330 = vmul.f32 %v322, %v329
        %v332 = vlaneseq
        %v333 = vshrl.u32 %v332, 7
        %v334 = vsub.s32 0, %v333
        %v335 = vrot.slane %v314, %v334
        %v337 = vmul.f32 %v330, %v335
        %v339 = vlaneseq
        %v340 = vshrl.u32 %v339, 7
        %v341 = vsub.s32 0, %v340
        %v342 = vrot.slane %v315, %v341
        %v344 = vadd.f32 %v337, %v342
        %v345 = vpack.c.bf16 %v344, %v344
        %v346 = vld [vmem:[#allocation5] sm:$0xf]
        %v347 = vld [vmem:[#allocation5 + $0x4] sm:$0xf]
        %v348 = vld [vmem:[#allocation5 + $0x8] sm:$0xf]
        %v349 = vld [vmem:[#allocation5 + $0xc] sm:$0xf]
        %v350 = vld [vmem:[%s4] sm:$0x1]
        %v352 = vlaneseq
        %v353 = vshrl.u32 %v352, 7
        %v354 = vsub.s32 0, %v353
        %v355 = vrot.slane %v350, %v354
        %v361 = vunpack.c.l.b16 %v346
        %v362 = vunpack.c.l.b16 %v347
        %v363 = vunpack.c.l.b16 %v348
        %v364 = vunpack.c.l.b16 %v349
        %v365 = vpack.c.b16 %v362, %v361
        %v366 = vpack.c.b16 %v364, %v363
        %v370 = vsel %vm316, %v345, 0
        %372 = vmatprep.subr.bf16.mxu0 0
        %373 = vmatpush1.bf16.msra.mxu0 %v365
        %374 = vmatprep.subr.bf16.mxu0 0
        %375 = vmatpush1.bf16.msra.mxu0 %v366
        %376 = vmatprep.subr.bf16.mxu0 0
        %377 = vmatpush1.bf16.msra.mxu0 0
        %378 = vmatprep.subr.bf16.mxu0 0
        %379 = vmatpush1.bf16.msra.mxu0 0
        %380 = vmatprep.subr.bf16.mxu0 0
        %381 = vmatpush1.bf16.msra.mxu0 0
        %382 = vmatprep.subr.bf16.mxu0 0
        %383 = vmatpush1.bf16.msra.mxu0 0
        %384 = vmatprep.subr.bf16.mxu0 0
        %385 = vmatpush1.bf16.msra.mxu0 0
        %386 = vmatprep.subr.bf16.mxu0 0
        %387 = vmatpush1.bf16.msra.mxu0 0
        %388 = vmatprep.subr.bf16.mxu0 0
        %389 = vmatpush1.bf16.msra.mxu0 0
        %390 = vmatprep.subr.bf16.mxu0 0
        %391 = vmatpush1.bf16.msra.mxu0 0
        %392 = vmatprep.subr.bf16.mxu0 0
        %393 = vmatpush1.bf16.msra.mxu0 0
        %394 = vmatprep.subr.bf16.mxu0 0
        %395 = vmatpush1.bf16.msra.mxu0 0
        %396 = vmatprep.subr.bf16.mxu0 0
        %397 = vmatpush1.bf16.msra.mxu0 0
        %398 = vmatprep.subr.bf16.mxu0 0
        %399 = vmatpush1.bf16.msra.mxu0 0
        %400 = vmatprep.subr.bf16.mxu0 0
        %401 = vmatpush1.bf16.msra.mxu0 0
        %402 = vmatprep.subr.bf16.mxu0 0
        %403 = vmatpush1.bf16.msra.mxu0 0
        %404 = vmatprep.mubr.bf16.mxu0 0
        %405 = vmatmul.mubr.bf16.gmra.mrb[0].mxu0 %v370
        %v406 = vpop.f32.mrb[0].mxu0
        %v407 = vadd.f32 %v355, %v406
        %v408 = vpop.f32.mrb[0].mxu0
        %v409 = vpop.f32.mrb[0].mxu0
        %v410 = vpop.f32.mrb[0].mxu0
        %411 = vdwg.mxu0
        %v412 = vpack.c.bf16 %v407, %v407
        %vm413 = vcmask 60416
        %414 = vst.msk [vmem:[%s304] sm:$0xf] %vm413, %v412
        %v416 = vunpack.c.l.b16 %v412
        %v417 = vpack.c.b16 %v416, %v416
        %418 = vrot.lane.b32.xlu0 %v417, 96
        %v419 = vpop.permute.xlu0 %418
        %421 = vst.msk [vmem:[%s311] sm:$0xf] %vm413, %v419
        %422 = vrot.lane.b32.xlu0 %v417, 120
        %v423 = vpop.permute.xlu0 %422
        %s425 = scalar_lea.vmem %s304, 4 [#allocation7]
        %426 = vst.msk [vmem:[%s425] sm:$0xf] %vm413, %v423
        %427 = vrot.lane.b32.xlu0 %v417, 88
        %v428 = vpop.permute.xlu0 %427
        %s430 = scalar_lea.vmem %s311, 4 [#allocation8]
        %431 = vst.msk [vmem:[%s430] sm:$0xf] %vm413, %v428
        %432 = vrot.lane.b32.xlu0 %v417, 112
        %v433 = vpop.permute.xlu0 %432
        %s435 = scalar_lea.vmem %s304, 8 [#allocation7]
        %436 = vst.msk [vmem:[%s435] sm:$0xf] %vm413, %v433
        %437 = vrot.lane.b32.xlu0 %v417, 80
        %v438 = vpop.permute.xlu0 %437
        %s440 = scalar_lea.vmem %s311, 8 [#allocation8]
        %441 = vst.msk [vmem:[%s440] sm:$0xf] %vm413, %v438
        %442 = vrot.lane.b32.xlu0 %v417, 104
        %v443 = vpop.permute.xlu0 %442
        %s445 = scalar_lea.vmem %s304, 12 [#allocation7]
        %446 = vst.msk [vmem:[%s445] sm:$0xf] %vm413, %v443
        %447 = vrot.lane.b32.xlu0 %v417, 72
        %v448 = vpop.permute.xlu0 %447
        %s450 = scalar_lea.vmem %s311, 12 [#allocation8]
        %451 = vst.msk [vmem:[%s450] sm:$0xf] %vm413, %v448
        %s452 = sand.u32 %s162, 1
        %s453 = scalar_lea.sflag [#allocation4], %s452
        %s454 = sand.u32 %s162, 1
        %s455 = smul.addr %s454, 16
        %s456 = scalar_lea.vmem [#allocation7], %s455
        %s457 = sand.u32 %s190, 1
        %s458 = scalar_lea.sflag [#allocation9], %s457
        %s459 = sand.u32 %s190, 1
        %s460 = smul.addr %s459, 16
        %s461 = scalar_lea.vmem [#allocation8], %s460
        // Predicated region
        $region49: #{tpu_custom_call.1} parent=39 // pred_check
          %p462 = pneg %p172
        $region50: #{tpu_custom_call.1} parent=39 // pred_check_branch
          %464 = sbr.rel (%p462) target = $region52
        $region51: #{tpu_custom_call.1} parent=39 // pred_region
          %s466 = ssub.s32 256, 256
          %467 = vsyncadd %s453, %s466
          %s468 = smul.addr %s32, 4
          %s469 = sadd.s32 %s33, %s468
          %s470 = smul.addr %s469, 64
          %s471 = scalar_lea.hbm %s5, %s470
          %s472 = sshll.u32 %s456, 4
          %s473 = int_to_ptr.vmem [resolvable:$true] %s472
          %478 = dma.vmem_to_hbm [thread:$0]  %s473, 256, %s471, %s453, 64, 64, 4
        $region52: #{tpu_custom_call.1} parent=39 // pred_fallthru
          _
        // Predicated region
        $region53: #{tpu_custom_call.1} parent=39 // pred_check
          %p479 = pneg %p200
        $region54: #{tpu_custom_call.1} parent=39 // pred_check_branch
          %481 = sbr.rel (%p479) target = $region56
        $region55: #{tpu_custom_call.1} parent=39 // pred_region
          %s483 = ssub.s32 256, 256
          %484 = vsyncadd %s458, %s483
          %s485 = smul.addr %s32, 4
          %s486 = sadd.s32 %s33, %s485
          %s487 = smul.addr %s486, 64
          %s488 = scalar_lea.hbm %s6, %s487
          %s489 = sshll.u32 %s461, 4
          %s490 = int_to_ptr.vmem [resolvable:$true] %s489
          %495 = dma.vmem_to_hbm [thread:$0]  %s490, 256, %s488, %s458, 64, 64, 4
        $region56: #{tpu_custom_call.1} parent=39 // pred_fallthru
          _
      $region40: #{tpu_custom_call.1} parent=5 // pred_fallthru
        _
      %p496 = scmp.le.s32.totalorder 2, %s23
      // Predicated region
      $region57: #{tpu_custom_call.1} parent=5 // pred_check
        %p497 = pneg %p496
      $region58: #{tpu_custom_call.1} parent=5 // pred_check_branch
        %499 = sbr.rel (%p497) target = $region60
      $region59: #{tpu_custom_call.1} parent=5 // pred_region
        %s500 = ssub.s32 %s23, 2
        // Predicated region
        $region61: #{tpu_custom_call.1} parent=59 // pred_check
          %p501 = pneg %p178
        $region62: #{tpu_custom_call.1} parent=59 // pred_check_branch
          %503 = sbr.rel (%p501) target = $region64
        $region63: #{tpu_custom_call.1} parent=59 // pred_region
          %s504 = sand.u32 %s163, 1
          %s505 = scalar_lea.sflag [#allocation4], %s504
          %s506 = sand.u32 %s163, 1
          %s507 = smul.addr %s506, 16
          %s508 = scalar_lea.vmem [#allocation7], %s507
          %509 = dma.done %s505, 256
        $region64: #{tpu_custom_call.1} parent=59 // pred_fallthru
          _
        // Predicated region
        $region65: #{tpu_custom_call.1} parent=59 // pred_check
          %p510 = pneg %p206
        $region66: #{tpu_custom_call.1} parent=59 // pred_check_branch
          %512 = sbr.rel (%p510) target = $region68
        $region67: #{tpu_custom_call.1} parent=59 // pred_region
          %s513 = sand.u32 %s191, 1
          %s514 = scalar_lea.sflag [#allocation9], %s513
          %s515 = sand.u32 %s191, 1
          %s516 = smul.addr %s515, 16
          %s517 = scalar_lea.vmem [#allocation8], %s516
          %518 = dma.done %s514, 256
        $region68: #{tpu_custom_call.1} parent=59 // pred_fallthru
          _
      $region60: #{tpu_custom_call.1} parent=5 // pred_fallthru
        _
    $region6: #{tpu_custom_call.1} parent=1 // loop_footer
      %s27 = sadd.s32 1, %s23
    $region7: #{tpu_custom_call.1} parent=1 // loop_footer_branch
      %22 = sbr.rel target = $region3
    $region8: #{tpu_custom_call.1} parent=1 // loop_exit
      _
    %519 = vsyncpa [#allocation3], 1
    %s520 = scalar_lea.sflag [#allocation3], 1
    %521 = vsyncpa %s520, 1
    %522 = vsyncpa [#allocation6], 1
    %523 = vsyncpa [#allocation4], 1
    %s524 = scalar_lea.sflag [#allocation4], 1
    %525 = vsyncpa %s524, 1
    %526 = vsyncpa [#allocation9], 1
    %s527 = scalar_lea.sflag [#allocation9], 1
    %528 = vsyncpa %s527, 1

</llo_original>
